<compile_context>
chip_gen: v6e
topology: v6e:2x2x1
jax: 0.10.0
libtpu: 0.0.40
codegen_flags: <defaults>
</compile_context>

<pallas_src>
import jax
import jax.numpy as jnp
from jax.experimental import pallas as pl
from jax.experimental.pallas import tpu as pltpu

EPS = 1e-5


# ------------------------------ Pallas kernel ------------------------------
def rrcnn_kernel(x_ref, w1_ref, b1_ref,
                 w3a_ref, sca_ref, sha_ref,
                 w3b_ref, scb_ref, shb_ref,
                 out_ref):
    H = x_ref.shape[0]          # rows of this image block
    WC = out_ref.shape[1]       # lane-packed W*Cout (multiple of 128 here)

    # Row masks for the vertical taps -- computed once, reused by all six conv
    # applications.  The wrapped row of each roll is the zero-padding row.
    row = jax.lax.broadcasted_iota(jnp.int32, (H, WC), 0)
    not_top = row != 0
    not_bot = row != H - 1

    def conv3_bn_relu(v, w, sc, sh):
        # v: (H, WC) f32 activation, lane layout lane = w*C + c.
        up = jnp.where(not_top, pltpu.roll(v, shift=1, axis=0), 0.0)      # act[r-1]
        dn = jnp.where(not_bot, pltpu.roll(v, shift=H - 1, axis=0), 0.0)  # act[r+1]
        x_cat = jnp.concatenate(
            [up.astype(jnp.bfloat16), v.astype(jnp.bfloat16),
             dn.astype(jnp.bfloat16)], axis=-1)                           # (H, 3*WC)
        acc = jnp.dot(x_cat, w, preferred_element_type=jnp.float32)       # (H, WC)
        return jnp.maximum(acc * sc + sh, 0.0)

    def recurrent(v, w_ref_, sc_ref_, sh_ref_):
        # Recurrent_block.forward with t=2 -> 3 conv applications.
        w = w_ref_[...]                                   # (3*WC, WC) bf16
        sc = jnp.broadcast_to(sc_ref_[...], (H, WC))      # hoisted broadcasts
        sh = jnp.broadcast_to(sh_ref_[...], (H, WC))
        x1 = conv3_bn_relu(v, w, sc, sh)
        x1 = conv3_bn_relu(v + x1, w, sc, sh)
        x1 = conv3_bn_relu(v + x1, w, sc, sh)
        return x1

    # 1x1 conv: block-diagonal packed weight -> one lane-dense bf16 matmul.
    x0 = jnp.dot(x_ref[...].astype(jnp.bfloat16), w1_ref[...],
                 preferred_element_type=jnp.float32) + b1_ref[...]

    xa = recurrent(x0, w3a_ref, sca_ref, sha_ref)
    xb = recurrent(xa, w3b_ref, scb_ref, shb_ref)

    out_ref[...] = (x0 + xb).astype(out_ref.dtype)


# ------------------------------ host wrapper -------------------------------
def rrcnn_forward(x_nchw, kp):
    """x_nchw: (N, Cin, H, W) float32.  Returns (N, Cout, H, W) float32."""
    N, Cin, H, W = x_nchw.shape
    WCin = W * Cin
    WCout = kp["w1"].shape[1]
    Cout = WCout // W

    # NCHW -> lane-packed (N*H, W*Cin).
    # TODO(synk): if the surrounding model stayed NHWC these wrapper transposes
    # (full HBM round trips) could be dropped entirely.
    x_packed = jnp.transpose(x_nchw, (0, 2, 3, 1)).reshape(N * H, WCin)
    x_packed = x_packed.astype(jnp.float32)

    full = lambda n: (0, 0)
    out_packed = pl.pallas_call(
        rrcnn_kernel,
        out_shape=jax.ShapeDtypeStruct((N * H, WCout), jnp.float32),
        grid=(N,),
        in_specs=[
            pl.BlockSpec((H, WCin), lambda n: (n, 0)),   # x, one image per step
            pl.BlockSpec((WCin, WCout), full),           # packed 1x1 weight (bf16)
            pl.BlockSpec((1, WCout), full),              # packed 1x1 bias
            pl.BlockSpec((3 * WCout, WCout), full),      # banded 3x3 weight A (bf16)
            pl.BlockSpec((1, WCout), full),              # BN scale A
            pl.BlockSpec((1, WCout), full),              # BN shift A
            pl.BlockSpec((3 * WCout, WCout), full),      # banded 3x3 weight B (bf16)
            pl.BlockSpec((1, WCout), full),              # BN scale B
            pl.BlockSpec((1, WCout), full),              # BN shift B
        ],
        out_specs=pl.BlockSpec((H, WCout), lambda n: (n, 0)),
        compiler_params=pltpu.CompilerParams(
            dimension_semantics=("parallel",),           # v7x: 2 TCs split batch
            vmem_limit_bytes=32 * 1024 * 1024),
    )(x_packed, kp["w1"], kp["b1"],
      kp["w3a"], kp["sca"], kp["sha"],
      kp["w3b"], kp["scb"], kp["shb"])

    out_nhwc = out_packed.reshape(N, H, W, Cout)
    return jnp.transpose(out_nhwc, (0, 3, 1, 2))


# ------------------------- parameter packing (host) -------------------------
def pack_per_channel(v, W):
    """(C,) per-channel vector -> (1, W*C) lane-packed (lane = w*C + c)."""
    return jnp.tile(v, W).reshape(1, -1)


def pack_conv1x1_weight(w_oihw, W):
    """(Cout, Cin, 1, 1) -> block-diagonal (W*Cin, W*Cout)."""
    w_t = jnp.transpose(w_oihw[:, :, 0, 0], (1, 0))           # (Cin, Cout)
    eye = jnp.eye(W, dtype=w_t.dtype)
    Cin, Cout = w_t.shape
    return jnp.einsum('pw,io->piwo', eye, w_t).reshape(W * Cin, W * Cout)


def pack_conv3_weight(w_oihw, W):
    """(Cout, Cin, 3, 3) -> banded block weight (3*W*Cin, W*Cout).

    Row = dy*(W*Cin) + p*Cin + ci, Col = w*Cout + co; entry is
    w[co, ci, dy, p-w+1] when |p-w| <= 1 else 0.  The band structure implements
    the horizontal zero padding of the 3x3 conv; vertical taps (dy) are handled
    in-kernel with pltpu.roll + masks.
    """
    Cout, Cin = w_oihw.shape[0], w_oihw.shape[1]
    blocks = jnp.transpose(w_oihw, (2, 3, 1, 0))              # (dy, dx, Cin, Cout)
    pos = jnp.arange(W)
    # ind[dx, p, w] = 1 iff p == w + dx - 1
    ind = (pos[None, :, None] ==
           pos[None, None, :] + (jnp.arange(3) - 1)[:, None, None]
           ).astype(blocks.dtype)
    wm = jnp.einsum('xpw,yxio->ypiwo', ind, blocks)           # (dy, p, ci, w, co)
    return wm.reshape(3 * W * Cin, W * Cout)


# --------------------------- pure-JAX reference ---------------------------
def reference_forward(x, w1, b1, blk_a, blk_b):
    def conv2d(x, w, b, pad):
        y = jax.lax.conv_general_dilated(
            x, w, window_strides=(1, 1), padding=[(pad, pad), (pad, pad)],
            dimension_numbers=("NCHW", "OIHW", "NCHW"),
            precision=jax.lax.Precision.HIGHEST)
        return y + b[None, :, None, None]

    def bn(x, gamma, beta, mean, var):
        s = (gamma / jnp.sqrt(var + EPS))[None, :, None, None]
        return (x - mean[None, :, None, None]) * s + beta[None, :, None, None]

    def cbr(x, w, b, g, be, m, v):
        return jnp.maximum(bn(conv2d(x, w, b, 1), g, be, m, v), 0.0)

    def recurrent(x, params):
        x1 = cbr(x, *params)
        x1 = cbr(x + x1, *params)
        x1 = cbr(x + x1, *params)
        return x1

    x0 = conv2d(x, w1, b1, 0)
    xa = recurrent(x0, blk_a)
    xb = recurrent(xa, blk_b)
    return x0 + xb


if __name__ == "__main__":
    N, Cin, Cout, H, W = 2, 4, 8, 16, 16

    key = jax.random.PRNGKey(0)
    keys = jax.random.split(key, 15)

    # PyTorch-layout synthetic parameters (deterministic).
    w1_oihw = jax.random.normal(keys[0], (Cout, Cin, 1, 1), jnp.float32) * 0.2
    b1 = jax.random.normal(keys[1], (Cout,), jnp.float32) * 0.1

    def make_block(kw, kb, kg, kbe, km, kv):
        w = jax.random.normal(kw, (Cout, Cout, 3, 3), jnp.float32) * 0.1
        b = jax.random.normal(kb, (Cout,), jnp.float32) * 0.1
        gamma = jax.random.uniform(kg, (Cout,), jnp.float32, 0.5, 1.5)
        beta = jax.random.normal(kbe, (Cout,), jnp.float32) * 0.1
        mean = jax.random.normal(km, (Cout,), jnp.float32) * 0.1
        var = jax.random.uniform(kv, (Cout,), jnp.float32, 0.5, 1.5)
        return (w, b, gamma, beta, mean, var)

    blk_a = make_block(*keys[2:8])
    blk_b = make_block(*keys[8:14])
    x = jax.random.normal(keys[14], (N, Cin, H, W), jnp.float32)

    # Fold conv bias + BN (eval semantics) into lane-packed scale/shift, build
    # banded / block-diagonal packed weights (bf16 at the MXU boundary).
    def conv3_kernel_params(w, b, gamma, beta, mean, var):
        sc = gamma / jnp.sqrt(var + EPS)
        sh = (b - mean) * sc + beta
        return (pack_conv3_weight(w, W).astype(jnp.bfloat16),
                pack_per_channel(sc, W), pack_per_channel(sh, W))

    w3a, sca, sha = conv3_kernel_params(*blk_a)
    w3b, scb, shb = conv3_kernel_params(*blk_b)
    kp = {
        "w1": pack_conv1x1_weight(w1_oihw, W).astype(jnp.bfloat16),
        "b1": pack_per_channel(b1, W),
        "w3a": w3a, "sca": sca, "sha": sha,
        "w3b": w3b, "scb": scb, "shb": shb,
    }

    out = jax.block_until_ready(rrcnn_forward(x, kp))
    ref = jax.block_until_ready(reference_forward(x, w1_oihw, b1, blk_a, blk_b))

    assert out.shape == (N, Cout, H, W), out.shape
    # bf16 MXU operands (f32 accumulation) across 7 chained matmuls -> looser
    # tolerance than the pure-f32 reference.
    assert jnp.allclose(out, ref, rtol=3e-2, atol=3e-2), (
        float(jnp.max(jnp.abs(out - ref))))
    print("KERNEL_OK")
</pallas_src>

<mosaic_0001>
module attributes {stable_mosaic.version = 11 : i64} {
  func.func @rrcnn_kernel(%arg0: i32, %arg1: memref<16x64xf32, #tpu.memory_space<vmem>>, %arg2: memref<64x128xbf16, #tpu.memory_space<vmem>>, %arg3: memref<1x128xf32, #tpu.memory_space<vmem>>, %arg4: memref<384x128xbf16, #tpu.memory_space<vmem>>, %arg5: memref<1x128xf32, #tpu.memory_space<vmem>>, %arg6: memref<1x128xf32, #tpu.memory_space<vmem>>, %arg7: memref<384x128xbf16, #tpu.memory_space<vmem>>, %arg8: memref<1x128xf32, #tpu.memory_space<vmem>>, %arg9: memref<1x128xf32, #tpu.memory_space<vmem>>, %arg10: memref<16x128xf32, #tpu.memory_space<vmem>>) attributes {dimension_semantics = [#tpu.dimension_semantics<parallel>], iteration_bounds = array<i64: 2>, scalar_prefetch = 0 : i64, scratch_operands = 0 : i64, tpu.core_type = #tpu.core_type<tc>, window_params = [{transform_indices = @transform_0, window_bounds = array<i64: 16, 64>}, {pipeline_mode = #tpu.pipeline_mode<synchronous>, transform_indices = @transform_1, window_bounds = array<i64: 64, 128>}, {pipeline_mode = #tpu.pipeline_mode<synchronous>, transform_indices = @transform_2, window_bounds = array<i64: 1, 128>}, {pipeline_mode = #tpu.pipeline_mode<synchronous>, transform_indices = @transform_3, window_bounds = array<i64: 384, 128>}, {pipeline_mode = #tpu.pipeline_mode<synchronous>, transform_indices = @transform_4, window_bounds = array<i64: 1, 128>}, {pipeline_mode = #tpu.pipeline_mode<synchronous>, transform_indices = @transform_5, window_bounds = array<i64: 1, 128>}, {pipeline_mode = #tpu.pipeline_mode<synchronous>, transform_indices = @transform_6, window_bounds = array<i64: 384, 128>}, {pipeline_mode = #tpu.pipeline_mode<synchronous>, transform_indices = @transform_7, window_bounds = array<i64: 1, 128>}, {pipeline_mode = #tpu.pipeline_mode<synchronous>, transform_indices = @transform_8, window_bounds = array<i64: 1, 128>}, {transform_indices = @transform_9, window_bounds = array<i64: 16, 128>}]} {
    %0 = tpu.iota {dimensions = array<i32: 0>} : vector<16x128xi32>
    %c0_i32 = arith.constant 0 : i32
    %1 = vector.broadcast %c0_i32 : i32 to vector<16x128xi32>
    %2 = arith.cmpi ne, %0, %1 : vector<16x128xi32>
    %c15_i32 = arith.constant 15 : i32
    %3 = vector.broadcast %c15_i32 : i32 to vector<16x128xi32>
    %4 = arith.cmpi ne, %0, %3 : vector<16x128xi32>
    %c0 = arith.constant 0 : index
    %c0_0 = arith.constant 0 : index
    %5 = vector.load %arg1[%c0, %c0_0] : memref<16x64xf32, #tpu.memory_space<vmem>>, vector<16x64xf32>
    %6 = arith.truncf %5 : vector<16x64xf32> to vector<16x64xbf16>
    %c0_1 = arith.constant 0 : index
    %c0_2 = arith.constant 0 : index
    %7 = vector.load %arg2[%c0_1, %c0_2] : memref<64x128xbf16, #tpu.memory_space<vmem>>, vector<64x128xbf16>
    %cst = arith.constant dense<0.000000e+00> : vector<16x128xf32>
    %8 = tpu.matmul %6, %7, %cst {dimension_numbers = #tpu.dot_dimension_numbers<[1], [0], [0], [1], [0, 0, 1, 1], [], []>} : vector<16x64xbf16>, vector<64x128xbf16>, vector<16x128xf32> -> vector<16x128xf32>
    %c0_3 = arith.constant 0 : index
    %c0_4 = arith.constant 0 : index
    %9 = vector.load %arg3[%c0_3, %c0_4] : memref<1x128xf32, #tpu.memory_space<vmem>>, vector<1x128xf32>
    %10 = vector.broadcast %9 : vector<1x128xf32> to vector<16x128xf32>
    %11 = arith.addf %8, %10 : vector<16x128xf32>
    %c0_5 = arith.constant 0 : index
    %c0_6 = arith.constant 0 : index
    %12 = vector.load %arg4[%c0_5, %c0_6] : memref<384x128xbf16, #tpu.memory_space<vmem>>, vector<384x128xbf16>
    %c0_7 = arith.constant 0 : index
    %c0_8 = arith.constant 0 : index
    %13 = vector.load %arg5[%c0_7, %c0_8] : memref<1x128xf32, #tpu.memory_space<vmem>>, vector<1x128xf32>
    %14 = vector.shape_cast %13 : vector<1x128xf32> to vector<1x128xf32>
    %15 = vector.broadcast %14 : vector<1x128xf32> to vector<16x128xf32>
    %c0_9 = arith.constant 0 : index
    %c0_10 = arith.constant 0 : index
    %16 = vector.load %arg6[%c0_9, %c0_10] : memref<1x128xf32, #tpu.memory_space<vmem>>, vector<1x128xf32>
    %17 = vector.shape_cast %16 : vector<1x128xf32> to vector<1x128xf32>
    %18 = vector.broadcast %17 : vector<1x128xf32> to vector<16x128xf32>
    %c1_i32 = arith.constant 1 : i32
    %19 = tpu.dynamic_rotate %11 by %c1_i32 dim 0 : vector<16x128xf32>, i32 -> vector<16x128xf32>
    %cst_11 = arith.constant 0.000000e+00 : f32
    %20 = vector.broadcast %cst_11 : f32 to vector<16x128xf32>
    %21 = arith.select %2, %19, %20 : vector<16x128xi1>, vector<16x128xf32>
    %c15_i32_12 = arith.constant 15 : i32
    %22 = tpu.dynamic_rotate %11 by %c15_i32_12 dim 0 : vector<16x128xf32>, i32 -> vector<16x128xf32>
    %cst_13 = arith.constant 0.000000e+00 : f32
    %23 = vector.broadcast %cst_13 : f32 to vector<16x128xf32>
    %24 = arith.select %4, %22, %23 : vector<16x128xi1>, vector<16x128xf32>
    %25 = arith.truncf %21 : vector<16x128xf32> to vector<16x128xbf16>
    %26 = arith.truncf %11 : vector<16x128xf32> to vector<16x128xbf16>
    %27 = arith.truncf %24 : vector<16x128xf32> to vector<16x128xbf16>
    %28 = tpu.concatenate %25, %26, %27 in 1 : vector<16x128xbf16>, vector<16x128xbf16>, vector<16x128xbf16> -> vector<16x384xbf16>
    %cst_14 = arith.constant dense<0.000000e+00> : vector<16x128xf32>
    %29 = tpu.matmul %28, %12, %cst_14 {dimension_numbers = #tpu.dot_dimension_numbers<[1], [0], [0], [1], [0, 0, 1, 1], [], []>} : vector<16x384xbf16>, vector<384x128xbf16>, vector<16x128xf32> -> vector<16x128xf32>
    %30 = arith.mulf %29, %15 : vector<16x128xf32>
    %31 = arith.addf %30, %18 : vector<16x128xf32>
    %cst_15 = arith.constant 0.000000e+00 : f32
    %32 = vector.broadcast %cst_15 : f32 to vector<16x128xf32>
    %33 = arith.maximumf %31, %32 : vector<16x128xf32>
    %34 = arith.addf %11, %33 : vector<16x128xf32>
    %c1_i32_16 = arith.constant 1 : i32
    %35 = tpu.dynamic_rotate %34 by %c1_i32_16 dim 0 : vector<16x128xf32>, i32 -> vector<16x128xf32>
    %cst_17 = arith.constant 0.000000e+00 : f32
    %36 = vector.broadcast %cst_17 : f32 to vector<16x128xf32>
    %37 = arith.select %2, %35, %36 : vector<16x128xi1>, vector<16x128xf32>
    %c15_i32_18 = arith.constant 15 : i32
    %38 = tpu.dynamic_rotate %34 by %c15_i32_18 dim 0 : vector<16x128xf32>, i32 -> vector<16x128xf32>
    %cst_19 = arith.constant 0.000000e+00 : f32
    %39 = vector.broadcast %cst_19 : f32 to vector<16x128xf32>
    %40 = arith.select %4, %38, %39 : vector<16x128xi1>, vector<16x128xf32>
    %41 = arith.truncf %37 : vector<16x128xf32> to vector<16x128xbf16>
    %42 = arith.truncf %34 : vector<16x128xf32> to vector<16x128xbf16>
    %43 = arith.truncf %40 : vector<16x128xf32> to vector<16x128xbf16>
    %44 = tpu.concatenate %41, %42, %43 in 1 : vector<16x128xbf16>, vector<16x128xbf16>, vector<16x128xbf16> -> vector<16x384xbf16>
    %cst_20 = arith.constant dense<0.000000e+00> : vector<16x128xf32>
    %45 = tpu.matmul %44, %12, %cst_20 {dimension_numbers = #tpu.dot_dimension_numbers<[1], [0], [0], [1], [0, 0, 1, 1], [], []>} : vector<16x384xbf16>, vector<384x128xbf16>, vector<16x128xf32> -> vector<16x128xf32>
    %46 = arith.mulf %45, %15 : vector<16x128xf32>
    %47 = arith.addf %46, %18 : vector<16x128xf32>
    %cst_21 = arith.constant 0.000000e+00 : f32
    %48 = vector.broadcast %cst_21 : f32 to vector<16x128xf32>
    %49 = arith.maximumf %47, %48 : vector<16x128xf32>
    %50 = arith.addf %11, %49 : vector<16x128xf32>
    %c1_i32_22 = arith.constant 1 : i32
    %51 = tpu.dynamic_rotate %50 by %c1_i32_22 dim 0 : vector<16x128xf32>, i32 -> vector<16x128xf32>
    %cst_23 = arith.constant 0.000000e+00 : f32
    %52 = vector.broadcast %cst_23 : f32 to vector<16x128xf32>
    %53 = arith.select %2, %51, %52 : vector<16x128xi1>, vector<16x128xf32>
    %c15_i32_24 = arith.constant 15 : i32
    %54 = tpu.dynamic_rotate %50 by %c15_i32_24 dim 0 : vector<16x128xf32>, i32 -> vector<16x128xf32>
    %cst_25 = arith.constant 0.000000e+00 : f32
    %55 = vector.broadcast %cst_25 : f32 to vector<16x128xf32>
    %56 = arith.select %4, %54, %55 : vector<16x128xi1>, vector<16x128xf32>
    %57 = arith.truncf %53 : vector<16x128xf32> to vector<16x128xbf16>
    %58 = arith.truncf %50 : vector<16x128xf32> to vector<16x128xbf16>
    %59 = arith.truncf %56 : vector<16x128xf32> to vector<16x128xbf16>
    %60 = tpu.concatenate %57, %58, %59 in 1 : vector<16x128xbf16>, vector<16x128xbf16>, vector<16x128xbf16> -> vector<16x384xbf16>
    %cst_26 = arith.constant dense<0.000000e+00> : vector<16x128xf32>
    %61 = tpu.matmul %60, %12, %cst_26 {dimension_numbers = #tpu.dot_dimension_numbers<[1], [0], [0], [1], [0, 0, 1, 1], [], []>} : vector<16x384xbf16>, vector<384x128xbf16>, vector<16x128xf32> -> vector<16x128xf32>
    %62 = arith.mulf %61, %15 : vector<16x128xf32>
    %63 = arith.addf %62, %18 : vector<16x128xf32>
    %cst_27 = arith.constant 0.000000e+00 : f32
    %64 = vector.broadcast %cst_27 : f32 to vector<16x128xf32>
    %65 = arith.maximumf %63, %64 : vector<16x128xf32>
    %c0_28 = arith.constant 0 : index
    %c0_29 = arith.constant 0 : index
    %66 = vector.load %arg7[%c0_28, %c0_29] : memref<384x128xbf16, #tpu.memory_space<vmem>>, vector<384x128xbf16>
    %c0_30 = arith.constant 0 : index
    %c0_31 = arith.constant 0 : index
    %67 = vector.load %arg8[%c0_30, %c0_31] : memref<1x128xf32, #tpu.memory_space<vmem>>, vector<1x128xf32>
    %68 = vector.shape_cast %67 : vector<1x128xf32> to vector<1x128xf32>
    %69 = vector.broadcast %68 : vector<1x128xf32> to vector<16x128xf32>
    %c0_32 = arith.constant 0 : index
    %c0_33 = arith.constant 0 : index
    %70 = vector.load %arg9[%c0_32, %c0_33] : memref<1x128xf32, #tpu.memory_space<vmem>>, vector<1x128xf32>
    %71 = vector.shape_cast %70 : vector<1x128xf32> to vector<1x128xf32>
    %72 = vector.broadcast %71 : vector<1x128xf32> to vector<16x128xf32>
    %c1_i32_34 = arith.constant 1 : i32
    %73 = tpu.dynamic_rotate %65 by %c1_i32_34 dim 0 : vector<16x128xf32>, i32 -> vector<16x128xf32>
    %cst_35 = arith.constant 0.000000e+00 : f32
    %74 = vector.broadcast %cst_35 : f32 to vector<16x128xf32>
    %75 = arith.select %2, %73, %74 : vector<16x128xi1>, vector<16x128xf32>
    %c15_i32_36 = arith.constant 15 : i32
    %76 = tpu.dynamic_rotate %65 by %c15_i32_36 dim 0 : vector<16x128xf32>, i32 -> vector<16x128xf32>
    %cst_37 = arith.constant 0.000000e+00 : f32
    %77 = vector.broadcast %cst_37 : f32 to vector<16x128xf32>
    %78 = arith.select %4, %76, %77 : vector<16x128xi1>, vector<16x128xf32>
    %79 = arith.truncf %75 : vector<16x128xf32> to vector<16x128xbf16>
    %80 = arith.truncf %65 : vector<16x128xf32> to vector<16x128xbf16>
    %81 = arith.truncf %78 : vector<16x128xf32> to vector<16x128xbf16>
    %82 = tpu.concatenate %79, %80, %81 in 1 : vector<16x128xbf16>, vector<16x128xbf16>, vector<16x128xbf16> -> vector<16x384xbf16>
    %cst_38 = arith.constant dense<0.000000e+00> : vector<16x128xf32>
    %83 = tpu.matmul %82, %66, %cst_38 {dimension_numbers = #tpu.dot_dimension_numbers<[1], [0], [0], [1], [0, 0, 1, 1], [], []>} : vector<16x384xbf16>, vector<384x128xbf16>, vector<16x128xf32> -> vector<16x128xf32>
    %84 = arith.mulf %83, %69 : vector<16x128xf32>
    %85 = arith.addf %84, %72 : vector<16x128xf32>
    %cst_39 = arith.constant 0.000000e+00 : f32
    %86 = vector.broadcast %cst_39 : f32 to vector<16x128xf32>
    %87 = arith.maximumf %85, %86 : vector<16x128xf32>
    %88 = arith.addf %65, %87 : vector<16x128xf32>
    %c1_i32_40 = arith.constant 1 : i32
    %89 = tpu.dynamic_rotate %88 by %c1_i32_40 dim 0 : vector<16x128xf32>, i32 -> vector<16x128xf32>
    %cst_41 = arith.constant 0.000000e+00 : f32
    %90 = vector.broadcast %cst_41 : f32 to vector<16x128xf32>
    %91 = arith.select %2, %89, %90 : vector<16x128xi1>, vector<16x128xf32>
    %c15_i32_42 = arith.constant 15 : i32
    %92 = tpu.dynamic_rotate %88 by %c15_i32_42 dim 0 : vector<16x128xf32>, i32 -> vector<16x128xf32>
    %cst_43 = arith.constant 0.000000e+00 : f32
    %93 = vector.broadcast %cst_43 : f32 to vector<16x128xf32>
    %94 = arith.select %4, %92, %93 : vector<16x128xi1>, vector<16x128xf32>
    %95 = arith.truncf %91 : vector<16x128xf32> to vector<16x128xbf16>
    %96 = arith.truncf %88 : vector<16x128xf32> to vector<16x128xbf16>
    %97 = arith.truncf %94 : vector<16x128xf32> to vector<16x128xbf16>
    %98 = tpu.concatenate %95, %96, %97 in 1 : vector<16x128xbf16>, vector<16x128xbf16>, vector<16x128xbf16> -> vector<16x384xbf16>
    %cst_44 = arith.constant dense<0.000000e+00> : vector<16x128xf32>
    %99 = tpu.matmul %98, %66, %cst_44 {dimension_numbers = #tpu.dot_dimension_numbers<[1], [0], [0], [1], [0, 0, 1, 1], [], []>} : vector<16x384xbf16>, vector<384x128xbf16>, vector<16x128xf32> -> vector<16x128xf32>
    %100 = arith.mulf %99, %69 : vector<16x128xf32>
    %101 = arith.addf %100, %72 : vector<16x128xf32>
    %cst_45 = arith.constant 0.000000e+00 : f32
    %102 = vector.broadcast %cst_45 : f32 to vector<16x128xf32>
    %103 = arith.maximumf %101, %102 : vector<16x128xf32>
    %104 = arith.addf %65, %103 : vector<16x128xf32>
    %c1_i32_46 = arith.constant 1 : i32
    %105 = tpu.dynamic_rotate %104 by %c1_i32_46 dim 0 : vector<16x128xf32>, i32 -> vector<16x128xf32>
    %cst_47 = arith.constant 0.000000e+00 : f32
    %106 = vector.broadcast %cst_47 : f32 to vector<16x128xf32>
    %107 = arith.select %2, %105, %106 : vector<16x128xi1>, vector<16x128xf32>
    %c15_i32_48 = arith.constant 15 : i32
    %108 = tpu.dynamic_rotate %104 by %c15_i32_48 dim 0 : vector<16x128xf32>, i32 -> vector<16x128xf32>
    %cst_49 = arith.constant 0.000000e+00 : f32
    %109 = vector.broadcast %cst_49 : f32 to vector<16x128xf32>
    %110 = arith.select %4, %108, %109 : vector<16x128xi1>, vector<16x128xf32>
    %111 = arith.truncf %107 : vector<16x128xf32> to vector<16x128xbf16>
    %112 = arith.truncf %104 : vector<16x128xf32> to vector<16x128xbf16>
    %113 = arith.truncf %110 : vector<16x128xf32> to vector<16x128xbf16>
    %114 = tpu.concatenate %111, %112, %113 in 1 : vector<16x128xbf16>, vector<16x128xbf16>, vector<16x128xbf16> -> vector<16x384xbf16>
    %cst_50 = arith.constant dense<0.000000e+00> : vector<16x128xf32>
    %115 = tpu.matmul %114, %66, %cst_50 {dimension_numbers = #tpu.dot_dimension_numbers<[1], [0], [0], [1], [0, 0, 1, 1], [], []>} : vector<16x384xbf16>, vector<384x128xbf16>, vector<16x128xf32> -> vector<16x128xf32>
    %116 = arith.mulf %115, %69 : vector<16x128xf32>
    %117 = arith.addf %116, %72 : vector<16x128xf32>
    %cst_51 = arith.constant 0.000000e+00 : f32
    %118 = vector.broadcast %cst_51 : f32 to vector<16x128xf32>
    %119 = arith.maximumf %117, %118 : vector<16x128xf32>
    %120 = arith.addf %11, %119 : vector<16x128xf32>
    %c0_52 = arith.constant 0 : index
    %c0_53 = arith.constant 0 : index
    %121 = vector.load %arg10[%c0_52, %c0_53] : memref<16x128xf32, #tpu.memory_space<vmem>>, vector<16x128xf32>
    tpu.vector_store %arg10[%c0_52, %c0_53], %120 {strides = array<i32>} : memref<16x128xf32, #tpu.memory_space<vmem>>, vector<16x128xf32>,
    return
  }
  func.func @transform_0(%arg0: i32) -> (i32, i32) {
    %c0_i32 = arith.constant 0 : i32
    %c0_i32_0 = arith.constant 0 : i32
    return %arg0, %c0_i32 : i32, i32
  }
  func.func @transform_1(%arg0: i32) -> (i32, i32) {
    %c0_i32 = arith.constant 0 : i32
    %c0_i32_0 = arith.constant 0 : i32
    %c0_i32_1 = arith.constant 0 : i32
    return %c0_i32, %c0_i32_0 : i32, i32
  }
  func.func @transform_2(%arg0: i32) -> (i32, i32) {
    %c0_i32 = arith.constant 0 : i32
    %c0_i32_0 = arith.constant 0 : i32
    %c0_i32_1 = arith.constant 0 : i32
    return %c0_i32, %c0_i32_0 : i32, i32
  }
  func.func @transform_3(%arg0: i32) -> (i32, i32) {
    %c0_i32 = arith.constant 0 : i32
    %c0_i32_0 = arith.constant 0 : i32
    %c0_i32_1 = arith.constant 0 : i32
    return %c0_i32, %c0_i32_0 : i32, i32
  }
  func.func @transform_4(%arg0: i32) -> (i32, i32) {
    %c0_i32 = arith.constant 0 : i32
    %c0_i32_0 = arith.constant 0 : i32
    %c0_i32_1 = arith.constant 0 : i32
    return %c0_i32, %c0_i32_0 : i32, i32
  }
  func.func @transform_5(%arg0: i32) -> (i32, i32) {
    %c0_i32 = arith.constant 0 : i32
    %c0_i32_0 = arith.constant 0 : i32
    %c0_i32_1 = arith.constant 0 : i32
    return %c0_i32, %c0_i32_0 : i32, i32
  }
  func.func @transform_6(%arg0: i32) -> (i32, i32) {
    %c0_i32 = arith.constant 0 : i32
    %c0_i32_0 = arith.constant 0 : i32
    %c0_i32_1 = arith.constant 0 : i32
    return %c0_i32, %c0_i32_0 : i32, i32
  }
  func.func @transform_7(%arg0: i32) -> (i32, i32) {
    %c0_i32 = arith.constant 0 : i32
    %c0_i32_0 = arith.constant 0 : i32
    %c0_i32_1 = arith.constant 0 : i32
    return %c0_i32, %c0_i32_0 : i32, i32
  }
  func.func @transform_8(%arg0: i32) -> (i32, i32) {
    %c0_i32 = arith.constant 0 : i32
    %c0_i32_0 = arith.constant 0 : i32
    %c0_i32_1 = arith.constant 0 : i32
    return %c0_i32, %c0_i32_0 : i32, i32
  }
  func.func @transform_9(%arg0: i32) -> (i32, i32) {
    %c0_i32 = arith.constant 0 : i32
    %c0_i32_0 = arith.constant 0 : i32
    return %arg0, %c0_i32 : i32, i32
  }
}

</mosaic_0001>

<llo_original>
// kernel: tpu_custom_call.1
$region0: #{tpu_custom_call.1}
  #allocation0 [shape = 'u32[]', space=smem, size = 0x4, offset = 0x4, fixed_abs, tag = 'smem constant byte address 0x4 - core index']
  #allocation1 [shape = 'u32[144,128]{1,0:T(1,128)}', space=vmem, size = 0x12000, scoped, tag = 'internal scratch']
  %s0 = inlined_call_operand.hbm [shape: f32[32,64], index: 0, kind: input, shape index: {}]
  %s1 = inlined_call_operand.hbm [shape: bf16[64,128], index: 1, kind: input, shape index: {}]
  %s2 = inlined_call_operand.vmem [shape: f32[1,128], index: 2, kind: input, shape index: {}]
  %s3 = inlined_call_operand.hbm [shape: bf16[384,128], index: 3, kind: input, shape index: {}]
  %s4 = inlined_call_operand.vmem [shape: f32[1,128], index: 4, kind: input, shape index: {}]
  %s5 = inlined_call_operand.vmem [shape: f32[1,128], index: 5, kind: input, shape index: {}]
  %s6 = inlined_call_operand.hbm [shape: bf16[384,128], index: 6, kind: input, shape index: {}]
  %s7 = inlined_call_operand.vmem [shape: f32[1,128], index: 7, kind: input, shape index: {}]
  %s8 = inlined_call_operand.vmem [shape: f32[1,128], index: 8, kind: input, shape index: {}]
  %s9 = inlined_call_operand.hbm [shape: f32[32,128], index: 9, kind: output, shape index: {}]
  %s10 = sld [smem:[#allocation0]]
  $region85: #{tpu_custom_call.1} parent=0
    _
  %s12 = ssub.s32 1, %s10
  %s13 = scalar_select 0, %s12, %s10
  $region1: #{tpu_custom_call.1} parent=0
    #allocation2 [shape = 'u8[16384]{0}', space=vmem, size = 0x4000, scoped, tag = 'input window, operand 0']
    #allocation3 [shape = 's32[2]{0}', space=sflag, size = 0x8, scoped, tag = 'scoped memory for tpu_custom_call.1']
    #allocation4 [shape = 's32[2]{0}', space=sflag, size = 0x8, scoped, tag = 'scoped memory for tpu_custom_call.1']
    #allocation5 [shape = 'u8[16384]{0}', space=vmem, size = 0x4000, scoped, tag = 'input window, operand 1, single buffered']
    #allocation6 [shape = 's32[1]{0}', space=sflag, size = 0x4, scoped, tag = 'scoped memory for tpu_custom_call.1']
    #allocation7 [shape = 'u8[98304]{0}', space=vmem, size = 0x18000, scoped, tag = 'input window, operand 3, single buffered']
    #allocation8 [shape = 'u8[98304]{0}', space=vmem, size = 0x18000, scoped, tag = 'input window, operand 6, single buffered']
    #allocation9 [shape = 's32[1]{0}', space=sflag, size = 0x4, scoped, tag = 'scoped memory for tpu_custom_call.1']
    #allocation10 [shape = 'u8[16384]{0}', space=vmem, size = 0x4000, scoped, tag = 'output window, operand 0']
    %14 = vsyncpa [#allocation3], 0
    %s15 = scalar_lea.sflag [#allocation3], 1
    %16 = vsyncpa %s15, 0
    %17 = vsyncpa [#allocation6], 0
    %18 = vsyncpa [#allocation9], 0
    %19 = vsyncpa [#allocation4], 0
    %s20 = scalar_lea.sflag [#allocation4], 1
    %21 = vsyncpa %s20, 0
    loop: start=0, step=1, limit=4
    $region2: #{tpu_custom_call.1} parent=1 // loop_pre_header
      _
    $region3: #{tpu_custom_call.1} parent=1 // loop_header
      %s23 = sphi 0, %s27
      %p24 = scmp.ge.s32.totalorder %s23, 4
      %s33 = sphi 0, %s35
      %s36 = sphi 0, %s33
      %s37 = sphi 0, %s36
      %s53 = sphi 0, %s37
      %s57 = sphi 0, %s57
      %s59 = sphi 0, %s57
      %s60 = sphi 0, %s59
      %s74 = sphi 0, %s60
      %s78 = sphi 0, %s78
      %s80 = sphi 0, %s78
      %s81 = sphi 0, %s80
      %s95 = sphi 0, %s81
      %s99 = sphi 0, %s99
      %s101 = sphi 0, %s99
      %s102 = sphi 0, %s101
      %s116 = sphi 0, %s102
      %s120 = sphi 0, %s120
      %s122 = sphi 0, %s120
      %s123 = sphi 0, %s122
      %s137 = sphi 0, %s123
      %s141 = sphi 0, %s141
      %s143 = sphi 0, %s141
      %s144 = sphi 0, %s143
      %s158 = sphi 0, %s144
      %s162 = sphi 0, %s162
      %s164 = sphi 0, %s162
      %s165 = sphi 0, %s164
      %s179 = sphi 0, %s165
      %s183 = sphi 0, %s183
      %s185 = sphi 0, %s183
      %s186 = sphi 0, %s185
      %s200 = sphi 0, %s186
      %s204 = sphi 0, %s204
      %s206 = sphi 0, %s204
      %s207 = sphi 0, %s206
      %s221 = sphi 0, %s207
      %s227 = sphi 0, %s229
      %s230 = sphi 0, %s227
      %s231 = sphi 0, %s230
      %s247 = sphi 0, %s231
    $region4: #{tpu_custom_call.1} parent=1 // loop_header_branch
      %26 = sbr.rel (%p24) target = $region8
    $region5: #{tpu_custom_call.1} parent=1 // loop_body
      %s28 = ssub.s32 %s23, 1
      %s29 = ssub.s32 %s23, 2
      %s30 = sadd.s32 %s23, 1
      %s31 = ssub.s32 %s23, %s30
      %p32 = scmp.eq.s32.totalorder %s31, 0
      %s34 = sadd.s32 %s33, 1
      %s35 = scalar_select %p32, %s33, %s34
      %p38 = pneg %p32
      %p39 = scmp.eq.s32.totalorder %s23, 1
      %p40 = por %p38, %p39
      %p41 = scmp.ne.s32.totalorder %s33, %s36
      %p42 = scmp.eq.s32.totalorder %s23, 0
      %p43 = por %p41, %p42
      %p44 = scmp.ne.s32.totalorder %s33, %s36
      %p45 = scmp.eq.s32.totalorder %s28, 1
      %p46 = por %p44, %p45
      %p47 = scmp.ne.s32.totalorder %s36, %s37
      %p48 = scmp.eq.s32.totalorder %s28, 0
      %p49 = por %p47, %p48
      %p50 = scmp.ne.s32.totalorder %s36, %s37
      %p51 = scmp.eq.s32.totalorder %s29, 1
      %p52 = por %p50, %p51
      %p54 = scmp.ne.s32.totalorder %s37, %s53
      %p55 = scmp.eq.s32.totalorder %s29, 0
      %p56 = por %p54, %p55
      %s58 = sadd.s32 %s57, 1
      %p61 = scmp.eq.s32.totalorder %s23, 1
      %p62 = scmp.ne.s32.totalorder %s57, %s59
      %p63 = scmp.eq.s32.totalorder %s23, 0
      %p64 = por %p62, %p63
      %p65 = scmp.ne.s32.totalorder %s57, %s59
      %p66 = scmp.eq.s32.totalorder %s28, 1
      %p67 = por %p65, %p66
      %p68 = scmp.ne.s32.totalorder %s59, %s60
      %p69 = scmp.eq.s32.totalorder %s28, 0
      %p70 = por %p68, %p69
      %p71 = scmp.ne.s32.totalorder %s59, %s60
      %p72 = scmp.eq.s32.totalorder %s29, 1
      %p73 = por %p71, %p72
      %p75 = scmp.ne.s32.totalorder %s60, %s74
      %p76 = scmp.eq.s32.totalorder %s29, 0
      %p77 = por %p75, %p76
      %s79 = sadd.s32 %s78, 1
      %p82 = scmp.eq.s32.totalorder %s23, 1
      %p83 = scmp.ne.s32.totalorder %s78, %s80
      %p84 = scmp.eq.s32.totalorder %s23, 0
      %p85 = por %p83, %p84
      %p86 = scmp.ne.s32.totalorder %s78, %s80
      %p87 = scmp.eq.s32.totalorder %s28, 1
      %p88 = por %p86, %p87
      %p89 = scmp.ne.s32.totalorder %s80, %s81
      %p90 = scmp.eq.s32.totalorder %s28, 0
      %p91 = por %p89, %p90
      %p92 = scmp.ne.s32.totalorder %s80, %s81
      %p93 = scmp.eq.s32.totalorder %s29, 1
      %p94 = por %p92, %p93
      %p96 = scmp.ne.s32.totalorder %s81, %s95
      %p97 = scmp.eq.s32.totalorder %s29, 0
      %p98 = por %p96, %p97
      %s100 = sadd.s32 %s99, 1
      %p103 = scmp.eq.s32.totalorder %s23, 1
      %p104 = scmp.ne.s32.totalorder %s99, %s101
      %p105 = scmp.eq.s32.totalorder %s23, 0
      %p106 = por %p104, %p105
      %p107 = scmp.ne.s32.totalorder %s99, %s101
      %p108 = scmp.eq.s32.totalorder %s28, 1
      %p109 = por %p107, %p108
      %p110 = scmp.ne.s32.totalorder %s101, %s102
      %p111 = scmp.eq.s32.totalorder %s28, 0
      %p112 = por %p110, %p111
      %p113 = scmp.ne.s32.totalorder %s101, %s102
      %p114 = scmp.eq.s32.totalorder %s29, 1
      %p115 = por %p113, %p114
      %p117 = scmp.ne.s32.totalorder %s102, %s116
      %p118 = scmp.eq.s32.totalorder %s29, 0
      %p119 = por %p117, %p118
      %s121 = sadd.s32 %s120, 1
      %p124 = scmp.eq.s32.totalorder %s23, 1
      %p125 = scmp.ne.s32.totalorder %s120, %s122
      %p126 = scmp.eq.s32.totalorder %s23, 0
      %p127 = por %p125, %p126
      %p128 = scmp.ne.s32.totalorder %s120, %s122
      %p129 = scmp.eq.s32.totalorder %s28, 1
      %p130 = por %p128, %p129
      %p131 = scmp.ne.s32.totalorder %s122, %s123
      %p132 = scmp.eq.s32.totalorder %s28, 0
      %p133 = por %p131, %p132
      %p134 = scmp.ne.s32.totalorder %s122, %s123
      %p135 = scmp.eq.s32.totalorder %s29, 1
      %p136 = por %p134, %p135
      %p138 = scmp.ne.s32.totalorder %s123, %s137
      %p139 = scmp.eq.s32.totalorder %s29, 0
      %p140 = por %p138, %p139
      %s142 = sadd.s32 %s141, 1
      %p145 = scmp.eq.s32.totalorder %s23, 1
      %p146 = scmp.ne.s32.totalorder %s141, %s143
      %p147 = scmp.eq.s32.totalorder %s23, 0
      %p148 = por %p146, %p147
      %p149 = scmp.ne.s32.totalorder %s141, %s143
      %p150 = scmp.eq.s32.totalorder %s28, 1
      %p151 = por %p149, %p150
      %p152 = scmp.ne.s32.totalorder %s143, %s144
      %p153 = scmp.eq.s32.totalorder %s28, 0
      %p154 = por %p152, %p153
      %p155 = scmp.ne.s32.totalorder %s143, %s144
      %p156 = scmp.eq.s32.totalorder %s29, 1
      %p157 = por %p155, %p156
      %p159 = scmp.ne.s32.totalorder %s144, %s158
      %p160 = scmp.eq.s32.totalorder %s29, 0
      %p161 = por %p159, %p160
      %s163 = sadd.s32 %s162, 1
      %p166 = scmp.eq.s32.totalorder %s23, 1
      %p167 = scmp.ne.s32.totalorder %s162, %s164
      %p168 = scmp.eq.s32.totalorder %s23, 0
      %p169 = por %p167, %p168
      %p170 = scmp.ne.s32.totalorder %s162, %s164
      %p171 = scmp.eq.s32.totalorder %s28, 1
      %p172 = por %p170, %p171
      %p173 = scmp.ne.s32.totalorder %s164, %s165
      %p174 = scmp.eq.s32.totalorder %s28, 0
      %p175 = por %p173, %p174
      %p176 = scmp.ne.s32.totalorder %s164, %s165
      %p177 = scmp.eq.s32.totalorder %s29, 1
      %p178 = por %p176, %p177
      %p180 = scmp.ne.s32.totalorder %s165, %s179
      %p181 = scmp.eq.s32.totalorder %s29, 0
      %p182 = por %p180, %p181
      %s184 = sadd.s32 %s183, 1
      %p187 = scmp.eq.s32.totalorder %s23, 1
      %p188 = scmp.ne.s32.totalorder %s183, %s185
      %p189 = scmp.eq.s32.totalorder %s23, 0
      %p190 = por %p188, %p189
      %p191 = scmp.ne.s32.totalorder %s183, %s185
      %p192 = scmp.eq.s32.totalorder %s28, 1
      %p193 = por %p191, %p192
      %p194 = scmp.ne.s32.totalorder %s185, %s186
      %p195 = scmp.eq.s32.totalorder %s28, 0
      %p196 = por %p194, %p195
      %p197 = scmp.ne.s32.totalorder %s185, %s186
      %p198 = scmp.eq.s32.totalorder %s29, 1
      %p199 = por %p197, %p198
      %p201 = scmp.ne.s32.totalorder %s186, %s200
      %p202 = scmp.eq.s32.totalorder %s29, 0
      %p203 = por %p201, %p202
      %s205 = sadd.s32 %s204, 1
      %p208 = scmp.eq.s32.totalorder %s23, 1
      %p209 = scmp.ne.s32.totalorder %s204, %s206
      %p210 = scmp.eq.s32.totalorder %s23, 0
      %p211 = por %p209, %p210
      %p212 = scmp.ne.s32.totalorder %s204, %s206
      %p213 = scmp.eq.s32.totalorder %s28, 1
      %p214 = por %p212, %p213
      %p215 = scmp.ne.s32.totalorder %s206, %s207
      %p216 = scmp.eq.s32.totalorder %s28, 0
      %p217 = por %p215, %p216
      %p218 = scmp.ne.s32.totalorder %s206, %s207
      %p219 = scmp.eq.s32.totalorder %s29, 1
      %p220 = por %p218, %p219
      %p222 = scmp.ne.s32.totalorder %s207, %s221
      %p223 = scmp.eq.s32.totalorder %s29, 0
      %p224 = por %p222, %p223
      %s225 = ssub.s32 %s23, %s30
      %p226 = scmp.eq.s32.totalorder %s225, 0
      %s228 = sadd.s32 %s227, 1
      %s229 = scalar_select %p226, %s227, %s228
      %p232 = pneg %p226
      %p233 = scmp.eq.s32.totalorder %s23, 1
      %p234 = por %p232, %p233
      %p235 = scmp.ne.s32.totalorder %s227, %s230
      %p236 = scmp.eq.s32.totalorder %s23, 0
      %p237 = por %p235, %p236
      %p238 = scmp.ne.s32.totalorder %s227, %s230
      %p239 = scmp.eq.s32.totalorder %s28, 1
      %p240 = por %p238, %p239
      %p241 = scmp.ne.s32.totalorder %s230, %s231
      %p242 = scmp.eq.s32.totalorder %s28, 0
      %p243 = por %p241, %p242
      %p244 = scmp.ne.s32.totalorder %s230, %s231
      %p245 = scmp.eq.s32.totalorder %s29, 1
      %p246 = por %p244, %p245
      %p248 = scmp.ne.s32.totalorder %s231, %s247
      %p249 = scmp.eq.s32.totalorder %s29, 0
      %p250 = por %p248, %p249
      %p251 = scmp.le.s32.totalorder 1, %s23
      %p252 = scmp.lt.s32.totalorder %s23, 3
      %p253 = pnand %p251, %p252
      %p254 = pneg %p253
      // Predicated region
      $region9: #{tpu_custom_call.1} parent=5 // pred_check
        _
      $region10: #{tpu_custom_call.1} parent=5 // pred_check_branch
        %256 = sbr.rel (%p253) target = $region12
      $region11: #{tpu_custom_call.1} parent=5 // pred_region
        %s257 = ssub.s32 %s23, 1
        // Predicated region
        $region13: #{tpu_custom_call.1} parent=11 // pred_check
          %p258 = pneg %p70
        $region14: #{tpu_custom_call.1} parent=11 // pred_check_branch
          %260 = sbr.rel (%p258) target = $region16
        $region15: #{tpu_custom_call.1} parent=11 // pred_region
          %s262 = ssub.s32 512, 512
          %263 = vsyncadd [#allocation6], %s262
          %s264 = sshll.u32 [#allocation5], 4
          %s265 = int_to_ptr.vmem [resolvable:$true] %s264
          %270 = dma.hbm_to_vmem [thread:$0]  %s1, 512, %s265, [#allocation6], 64, 64, 4
        $region16: #{tpu_custom_call.1} parent=11 // pred_fallthru
          _
        // Predicated region
        $region17: #{tpu_custom_call.1} parent=11 // pred_check
          %p271 = pneg %p91
        $region18: #{tpu_custom_call.1} parent=11 // pred_check_branch
          %273 = sbr.rel (%p271) target = $region20
        $region19: #{tpu_custom_call.1} parent=11 // pred_region
          _
        $region20: #{tpu_custom_call.1} parent=11 // pred_fallthru
          _
        // Predicated region
        $region21: #{tpu_custom_call.1} parent=11 // pred_check
          %p274 = pneg %p112
        $region22: #{tpu_custom_call.1} parent=11 // pred_check_branch
          %276 = sbr.rel (%p274) target = $region24
        $region23: #{tpu_custom_call.1} parent=11 // pred_region
          %s278 = ssub.s32 3072, 3072
          %279 = vsyncadd [#allocation6], %s278
          %s280 = sshll.u32 [#allocation7], 4
          %s281 = int_to_ptr.vmem [resolvable:$true] %s280
          %286 = dma.hbm_to_vmem [thread:$0]  %s3, 3072, %s281, [#allocation6], 64, 64, 4
        $region24: #{tpu_custom_call.1} parent=11 // pred_fallthru
          _
        // Predicated region
        $region25: #{tpu_custom_call.1} parent=11 // pred_check
          %p287 = pneg %p133
        $region26: #{tpu_custom_call.1} parent=11 // pred_check_branch
          %289 = sbr.rel (%p287) target = $region28
        $region27: #{tpu_custom_call.1} parent=11 // pred_region
          _
        $region28: #{tpu_custom_call.1} parent=11 // pred_fallthru
          _
        // Predicated region
        $region29: #{tpu_custom_call.1} parent=11 // pred_check
          %p290 = pneg %p154
        $region30: #{tpu_custom_call.1} parent=11 // pred_check_branch
          %292 = sbr.rel (%p290) target = $region32
        $region31: #{tpu_custom_call.1} parent=11 // pred_region
          _
        $region32: #{tpu_custom_call.1} parent=11 // pred_fallthru
          _
        // Predicated region
        $region33: #{tpu_custom_call.1} parent=11 // pred_check
          %p293 = pneg %p175
        $region34: #{tpu_custom_call.1} parent=11 // pred_check_branch
          %295 = sbr.rel (%p293) target = $region36
        $region35: #{tpu_custom_call.1} parent=11 // pred_region
          %s297 = ssub.s32 3072, 3072
          %298 = vsyncadd [#allocation9], %s297
          %s299 = sshll.u32 [#allocation8], 4
          %s300 = int_to_ptr.vmem [resolvable:$true] %s299
          %305 = dma.hbm_to_vmem [thread:$0]  %s6, 3072, %s300, [#allocation9], 64, 64, 4
        $region36: #{tpu_custom_call.1} parent=11 // pred_fallthru
          _
        // Predicated region
        $region37: #{tpu_custom_call.1} parent=11 // pred_check
          %p306 = pneg %p196
        $region38: #{tpu_custom_call.1} parent=11 // pred_check_branch
          %308 = sbr.rel (%p306) target = $region40
        $region39: #{tpu_custom_call.1} parent=11 // pred_region
          _
        $region40: #{tpu_custom_call.1} parent=11 // pred_fallthru
          _
        // Predicated region
        $region41: #{tpu_custom_call.1} parent=11 // pred_check
          %p309 = pneg %p217
        $region42: #{tpu_custom_call.1} parent=11 // pred_check_branch
          %311 = sbr.rel (%p309) target = $region44
        $region43: #{tpu_custom_call.1} parent=11 // pred_region
          _
        $region44: #{tpu_custom_call.1} parent=11 // pred_fallthru
          _
      $region12: #{tpu_custom_call.1} parent=5 // pred_fallthru
        _
      %p312 = scmp.lt.s32.totalorder %s23, 2
      // Predicated region
      $region45: #{tpu_custom_call.1} parent=5 // pred_check
        %p313 = pneg %p312
      $region46: #{tpu_custom_call.1} parent=5 // pred_check_branch
        %315 = sbr.rel (%p313) target = $region48
      $region47: #{tpu_custom_call.1} parent=5 // pred_region
        // Predicated region
        $region49: #{tpu_custom_call.1} parent=47 // pred_check
          %p316 = pneg %p43
        $region50: #{tpu_custom_call.1} parent=47 // pred_check_branch
          %318 = sbr.rel (%p316) target = $region52
        $region51: #{tpu_custom_call.1} parent=47 // pred_region
          %s319 = sand.u32 %s33, 1
          %s320 = scalar_lea.sflag [#allocation3], %s319
          %s321 = sand.u32 %s33, 1
          %s322 = smul.addr %s321, 16
          %s323 = scalar_lea.vmem [#allocation2], %s322
          %s324 = smul.u32 2, %s23
          %s326 = ssub.s32 256, 256
          %327 = vsyncadd %s320, %s326
          %s328 = smul.addr %s324, 128
          %s329 = scalar_lea.hbm %s0, %s328
          %s330 = sshll.u32 %s323, 4
          %s331 = int_to_ptr.vmem [resolvable:$true] %s330
          %336 = dma.hbm_to_vmem [thread:$0]  %s329, 256, %s331, %s320, 128, 128, 8
        $region52: #{tpu_custom_call.1} parent=47 // pred_fallthru
          _
      $region48: #{tpu_custom_call.1} parent=5 // pred_fallthru
        _
      %p337 = scmp.le.s32.totalorder 1, %s23
      %p338 = scmp.lt.s32.totalorder %s23, 3
      %p339 = pnand %p337, %p338
      %p340 = pneg %p339
      // Predicated region
      $region53: #{tpu_custom_call.1} parent=5 // pred_check
        _
      $region54: #{tpu_custom_call.1} parent=5 // pred_check_branch
        %342 = sbr.rel (%p339) target = $region56
      $region55: #{tpu_custom_call.1} parent=5 // pred_region
        %s343 = ssub.s32 %s23, 1
        %s344 = sand.u32 %s36, 1
        %s345 = scalar_lea.sflag [#allocation3], %s344
        %s346 = sand.u32 %s36, 1
        %s347 = smul.addr %s346, 16
        %s348 = scalar_lea.vmem [#allocation2], %s347
        // Predicated region
        $region57: #{tpu_custom_call.1} parent=55 // pred_check
          %p349 = pneg %p49
        $region58: #{tpu_custom_call.1} parent=55 // pred_check_branch
          %351 = sbr.rel (%p349) target = $region60
        $region59: #{tpu_custom_call.1} parent=55 // pred_region
          %352 = dma.done %s345, 256
        $region60: #{tpu_custom_call.1} parent=55 // pred_fallthru
          _
        // Predicated region
        $region61: #{tpu_custom_call.1} parent=55 // pred_check
          %p353 = pneg %p70
        $region62: #{tpu_custom_call.1} parent=55 // pred_check_branch
          %355 = sbr.rel (%p353) target = $region64
        $region63: #{tpu_custom_call.1} parent=55 // pred_region
          %356 = dma.done [#allocation6], 512
        $region64: #{tpu_custom_call.1} parent=55 // pred_fallthru
          _
        // Predicated region
        $region65: #{tpu_custom_call.1} parent=55 // pred_check
          %p357 = pneg %p112
        $region66: #{tpu_custom_call.1} parent=55 // pred_check_branch
          %359 = sbr.rel (%p357) target = $region68
        $region67: #{tpu_custom_call.1} parent=55 // pred_region
          %360 = dma.done [#allocation6], 3072
        $region68: #{tpu_custom_call.1} parent=55 // pred_fallthru
          _
        // Predicated region
        $region69: #{tpu_custom_call.1} parent=55 // pred_check
          %p361 = pneg %p175
        $region70: #{tpu_custom_call.1} parent=55 // pred_check_branch
          %363 = sbr.rel (%p361) target = $region72
        $region71: #{tpu_custom_call.1} parent=55 // pred_region
          %364 = dma.done [#allocation9], 3072
        $region72: #{tpu_custom_call.1} parent=55 // pred_fallthru
          _
        %s365 = sand.u32 %s36, 1
        %s366 = scalar_lea.sflag [#allocation3], %s365
        %s367 = sand.u32 %s36, 1
        %s368 = smul.addr %s367, 16
        %s369 = scalar_lea.vmem [#allocation2], %s368
        %p370 = pneg %p49
        %p371 = pneg %p46
        %p372 = pneg %p70
        %p373 = pneg %p67
        %p374 = pneg %p91
        %p375 = pneg %p88
        %p376 = pneg %p112
        %p377 = pneg %p109
        %p378 = pneg %p133
        %p379 = pneg %p130
        %p380 = pneg %p154
        %p381 = pneg %p151
        %p382 = pneg %p175
        %p383 = pneg %p172
        %p384 = pneg %p196
        %p385 = pneg %p193
        %p386 = pneg %p217
        %p387 = pneg %p214
        %p388 = pneg %p243
        %p389 = pneg %p240
        %s390 = sand.u32 %s230, 1
        %s391 = scalar_lea.sflag [#allocation4], %s390
        %s392 = sand.u32 %s230, 1
        %s393 = smul.addr %s392, 16
        %s394 = scalar_lea.vmem [#allocation10], %s393
        %s395 = smul.u32 2, %s28
        %s396 = smul.u32 2, %s28
        %v398 = vlaneseq
        %v399 = vshrl.u32 %v398, 7
        %v400 = vadd.s32 %v399, 8
        %vm401 = vcmp.ne.s32.totalorder %v399, 0
        %vm402 = vcmp.ne.s32.totalorder %v400, 0
        %vm403 = vcmp.ne.s32.totalorder %v399, 15
        %vm404 = vcmp.ne.s32.totalorder %v400, 15
        %v405 = vld [vmem:[%s348] sm:$0xff]
        %v406 = vld [vmem:[%s348 + $0x8] sm:$0xff]
        %v407 = vpack.c.bf16 %v406, %v405
        %v408 = vld [vmem:[#allocation5] sm:$0xf]
        %v409 = vld [vmem:[#allocation5 + $0x4] sm:$0xf]
        %v410 = vld [vmem:[#allocation5 + $0x8] sm:$0xf]
        %v411 = vld [vmem:[#allocation5 + $0xc] sm:$0xf]
        %v412 = vld [vmem:[#allocation5 + $0x10] sm:$0xf]
        %v413 = vld [vmem:[#allocation5 + $0x14] sm:$0xf]
        %v414 = vld [vmem:[#allocation5 + $0x18] sm:$0xf]
        %v415 = vld [vmem:[#allocation5 + $0x1c] sm:$0xf]
        %v416 = vld [vmem:[%s2] sm:$0x1]
        %v418 = vlaneseq
        %v419 = vshrl.u32 %v418, 7
        %v420 = vsub.s32 0, %v419
        %v421 = vrot.slane %v416, %v420
        %v431 = vunpack.c.l.b16 %v408
        %v432 = vunpack.c.l.b16 %v409
        %v433 = vunpack.c.l.b16 %v410
        %v434 = vunpack.c.l.b16 %v411
        %v435 = vunpack.c.l.b16 %v412
        %v436 = vunpack.c.l.b16 %v413
        %v437 = vunpack.c.l.b16 %v414
        %v438 = vunpack.c.l.b16 %v415
        %v439 = vpack.c.b16 %v432, %v431
        %v440 = vpack.c.b16 %v434, %v433
        %v441 = vpack.c.b16 %v436, %v435
        %v442 = vpack.c.b16 %v438, %v437
        %vm447 = vcmask 523264
        %v449 = vsel %vm447, %v407, 0
        %451 = vmatprep.subr.bf16.mxu0 0
        %452 = vmatpush1.bf16.msra.mxu0 0
        %453 = vmatprep.subr.bf16.mxu0 0
        %454 = vmatpush1.bf16.msra.mxu0 0
        %455 = vmatprep.subr.bf16.mxu0 0
        %456 = vmatpush1.bf16.msra.mxu0 0
        %457 = vmatprep.subr.bf16.mxu0 0
        %458 = vmatpush1.bf16.msra.mxu0 0
        %459 = vmatprep.subr.bf16.mxu0 0
        %460 = vmatpush1.bf16.msra.mxu0 %v442
        %461 = vmatprep.subr.bf16.mxu0 0
        %462 = vmatpush1.bf16.msra.mxu0 %v441
        %463 = vmatprep.subr.bf16.mxu0 0
        %464 = vmatpush1.bf16.msra.mxu0 %v440
        %465 = vmatprep.subr.bf16.mxu0 0
        %466 = vmatpush1.bf16.msra.mxu0 %v439
        %467 = vmatprep.subr.bf16.mxu0 0
        %468 = vmatpush2.bf16.msra.mxu0 0
        %469 = vmatprep.subr.bf16.mxu0 0
        %470 = vmatpush2.bf16.msra.mxu0 0
        %471 = vmatprep.subr.bf16.mxu0 0
        %472 = vmatpush2.bf16.msra.mxu0 0
        %473 = vmatprep.subr.bf16.mxu0 0
        %474 = vmatpush2.bf16.msra.mxu0 0
        %475 = vmatprep.subr.bf16.mxu0 0
        %476 = vmatpush2.bf16.msra.mxu0 0
        %477 = vmatprep.subr.bf16.mxu0 0
        %478 = vmatpush2.bf16.msra.mxu0 0
        %479 = vmatprep.subr.bf16.mxu0 0
        %480 = vmatpush2.bf16.msra.mxu0 0
        %481 = vmatprep.subr.bf16.mxu0 0
        %482 = vmatpush2.bf16.msra.mxu0 0
        %483 = vmatprep.mubr.bf16.mxu0 0
        %484 = vmatmul.mubr.bf16.gmra.mxu0 %v449
        %v485 = vpop.f32.mrf.mxu0
        %v486 = vadd.f32 %v421, %v485
        %v487 = vpop.f32.mrf.mxu0
        %v488 = vpop.f32.mrf.mxu0
        %v489 = vadd.f32 %v421, %v488
        %v490 = vpop.f32.mrf.mxu0
        %491 = vdwg.mxu0
        %v492 = vld [vmem:[#allocation7] sm:$0xf]
        %v493 = vld [vmem:[#allocation7 + $0x4] sm:$0xf]
        %v494 = vld [vmem:[#allocation7 + $0x8] sm:$0xf]
        %v495 = vld [vmem:[#allocation7 + $0xc] sm:$0xf]
        %v496 = vld [vmem:[#allocation7 + $0x10] sm:$0xf]
        %v497 = vld [vmem:[#allocation7 + $0x14] sm:$0xf]
        %v498 = vld [vmem:[#allocation7 + $0x18] sm:$0xf]
        %v499 = vld [vmem:[#allocation7 + $0x1c] sm:$0xf]
        %v500 = vld [vmem:[#allocation7 + $0x20] sm:$0xf]
        %v501 = vld [vmem:[#allocation7 + $0x24] sm:$0xf]
        %v502 = vld [vmem:[#allocation7 + $0x28] sm:$0xf]
        %v503 = vld [vmem:[#allocation7 + $0x2c] sm:$0xf]
        %v504 = vld [vmem:[#allocation7 + $0x30] sm:$0xf]
        %v505 = vld [vmem:[#allocation7 + $0x34] sm:$0xf]
        %v506 = vld [vmem:[#allocation7 + $0x38] sm:$0xf]
        %v507 = vld [vmem:[#allocation7 + $0x3c] sm:$0xf]
        %v508 = vld [vmem:[#allocation7 + $0x40] sm:$0xf]
        %v509 = vld [vmem:[#allocation7 + $0x44] sm:$0xf]
        %v510 = vld [vmem:[#allocation7 + $0x48] sm:$0xf]
        %v511 = vld [vmem:[#allocation7 + $0x4c] sm:$0xf]
        %v512 = vld [vmem:[#allocation7 + $0x50] sm:$0xf]
        %v513 = vld [vmem:[#allocation7 + $0x54] sm:$0xf]
        %v514 = vld [vmem:[#allocation7 + $0x58] sm:$0xf]
        %v515 = vld [vmem:[#allocation7 + $0x5c] sm:$0xf]
        %v516 = vld [vmem:[#allocation7 + $0x60] sm:$0xf]
        %v517 = vld [vmem:[#allocation7 + $0x64] sm:$0xf]
        %v518 = vld [vmem:[#allocation7 + $0x68] sm:$0xf]
        %v519 = vld [vmem:[#allocation7 + $0x6c] sm:$0xf]
        %v520 = vld [vmem:[#allocation7 + $0x70] sm:$0xf]
        %v521 = vld [vmem:[#allocation7 + $0x74] sm:$0xf]
        %v522 = vld [vmem:[#allocation7 + $0x78] sm:$0xf]
        %v523 = vld [vmem:[#allocation7 + $0x7c] sm:$0xf]
        %v524 = vld [vmem:[#allocation7 + $0x80] sm:$0xf]
        %v525 = vld [vmem:[#allocation7 + $0x84] sm:$0xf]
        %v526 = vld [vmem:[#allocation7 + $0x88] sm:$0xf]
        %v527 = vld [vmem:[#allocation7 + $0x8c] sm:$0xf]
        %v528 = vld [vmem:[#allocation7 + $0x90] sm:$0xf]
        %v529 = vld [vmem:[#allocation7 + $0x94] sm:$0xf]
        %v530 = vld [vmem:[#allocation7 + $0x98] sm:$0xf]
        %v531 = vld [vmem:[#allocation7 + $0x9c] sm:$0xf]
        %v532 = vld [vmem:[#allocation7 + $0xa0] sm:$0xf]
        %v533 = vld [vmem:[#allocation7 + $0xa4] sm:$0xf]
        %v534 = vld [vmem:[#allocation7 + $0xa8] sm:$0xf]
        %v535 = vld [vmem:[#allocation7 + $0xac] sm:$0xf]
        %v536 = vld [vmem:[#allocation7 + $0xb0] sm:$0xf]
        %v537 = vld [vmem:[#allocation7 + $0xb4] sm:$0xf]
        %v538 = vld [vmem:[#allocation7 + $0xb8] sm:$0xf]
        %v539 = vld [vmem:[#allocation7 + $0xbc] sm:$0xf]
        %v540 = vld [vmem:[%s4] sm:$0x1]
        %v542 = vlaneseq
        %v543 = vshrl.u32 %v542, 7
        %v544 = vsub.s32 0, %v543
        %v545 = vrot.slane %v540, %v544
        %v547 = vld [vmem:[%s5] sm:$0x1]
        %v549 = vlaneseq
        %v550 = vshrl.u32 %v549, 7
        %v551 = vsub.s32 0, %v550
        %v552 = vrot.slane %v547, %v551
        %v554 = vrot.slane %v486, 7
        %v555 = vrot.slane %v489, 7
        %vm556 = vcmp.lt.s32.totalorder %v399, 1
        %v557 = vsel %vm556, %v554, %v555
        %v558 = vsel %vm556, %v555, %v554
        %v559 = vsel %vm401, %v558, 0.0
        %v560 = vsel %vm402, %v557, 0.0
        %v561 = vrot.slane %v486, 1
        %v562 = vrot.slane %v489, 1
        %vm563 = vcmp.lt.s32.totalorder %v399, 7
        %v564 = vsel %vm563, %v561, %v562
        %v565 = vsel %vm563, %v562, %v561
        %v566 = vsel %vm403, %v564, 0.0
        %v567 = vsel %vm404, %v565, 0.0
        %v568 = vpack.c.bf16 %v560, %v559
        %v569 = vpack.c.bf16 %v489, %v486
        %v570 = vpack.c.bf16 %v567, %v566
        %v619 = vunpack.c.l.b16 %v492
        %v620 = vunpack.c.l.b16 %v493
        %v621 = vunpack.c.l.b16 %v494
        %v622 = vunpack.c.l.b16 %v495
        %v623 = vunpack.c.l.b16 %v496
        %v624 = vunpack.c.l.b16 %v497
        %v625 = vunpack.c.l.b16 %v498
        %v626 = vunpack.c.l.b16 %v499
        %v627 = vunpack.c.l.b16 %v500
        %v628 = vunpack.c.l.b16 %v501
        %v629 = vunpack.c.l.b16 %v502
        %v630 = vunpack.c.l.b16 %v503
        %v631 = vunpack.c.l.b16 %v504
        %v632 = vunpack.c.l.b16 %v505
        %v633 = vunpack.c.l.b16 %v506
        %v634 = vunpack.c.l.b16 %v507
        %v635 = vunpack.c.l.b16 %v508
        %v636 = vunpack.c.l.b16 %v509
        %v637 = vunpack.c.l.b16 %v510
        %v638 = vunpack.c.l.b16 %v511
        %v639 = vunpack.c.l.b16 %v512
        %v640 = vunpack.c.l.b16 %v513
        %v641 = vunpack.c.l.b16 %v514
        %v642 = vunpack.c.l.b16 %v515
        %v643 = vunpack.c.l.b16 %v516
        %v644 = vunpack.c.l.b16 %v517
        %v645 = vunpack.c.l.b16 %v518
        %v646 = vunpack.c.l.b16 %v519
        %v647 = vunpack.c.l.b16 %v520
        %v648 = vunpack.c.l.b16 %v521
        %v649 = vunpack.c.l.b16 %v522
        %v650 = vunpack.c.l.b16 %v523
        %v651 = vunpack.c.l.b16 %v524
        %v652 = vunpack.c.l.b16 %v525
        %v653 = vunpack.c.l.b16 %v526
        %v654 = vunpack.c.l.b16 %v527
        %v655 = vunpack.c.l.b16 %v528
        %v656 = vunpack.c.l.b16 %v529
        %v657 = vunpack.c.l.b16 %v530
        %v658 = vunpack.c.l.b16 %v531
        %v659 = vunpack.c.l.b16 %v532
        %v660 = vunpack.c.l.b16 %v533
        %v661 = vunpack.c.l.b16 %v534
        %v662 = vunpack.c.l.b16 %v535
        %v663 = vunpack.c.l.b16 %v536
        %v664 = vunpack.c.l.b16 %v537
        %v665 = vunpack.c.l.b16 %v538
        %v666 = vunpack.c.l.b16 %v539
        %v667 = vpack.c.b16 %v620, %v619
        %v668 = vpack.c.b16 %v622, %v621
        %v669 = vpack.c.b16 %v624, %v623
        %v670 = vpack.c.b16 %v626, %v625
        %v671 = vpack.c.b16 %v628, %v627
        %v672 = vpack.c.b16 %v630, %v629
        %v673 = vpack.c.b16 %v632, %v631
        %v674 = vpack.c.b16 %v634, %v633
        %v675 = vpack.c.b16 %v636, %v635
        %v676 = vpack.c.b16 %v638, %v637
        %v677 = vpack.c.b16 %v640, %v639
        %v678 = vpack.c.b16 %v642, %v641
        %v679 = vpack.c.b16 %v644, %v643
        %v680 = vpack.c.b16 %v646, %v645
        %v681 = vpack.c.b16 %v648, %v647
        %v682 = vpack.c.b16 %v650, %v649
        %v683 = vpack.c.b16 %v652, %v651
        %v684 = vpack.c.b16 %v654, %v653
        %v685 = vpack.c.b16 %v656, %v655
        %v686 = vpack.c.b16 %v658, %v657
        %v687 = vpack.c.b16 %v660, %v659
        %v688 = vpack.c.b16 %v662, %v661
        %v689 = vpack.c.b16 %v664, %v663
        %v690 = vpack.c.b16 %v666, %v665
        %715 = vmatprep.subr.bf16.mxu0 0
        %716 = vmatpush1.bf16.msra.mxu0 %v674
        %717 = vmatprep.subr.bf16.mxu0 0
        %718 = vmatpush1.bf16.msra.mxu0 %v673
        %719 = vmatprep.subr.bf16.mxu0 0
        %720 = vmatpush1.bf16.msra.mxu0 %v672
        %721 = vmatprep.subr.bf16.mxu0 0
        %722 = vmatpush1.bf16.msra.mxu0 %v671
        %723 = vmatprep.subr.bf16.mxu0 0
        %724 = vmatpush1.bf16.msra.mxu0 %v670
        %725 = vmatprep.subr.bf16.mxu0 0
        %726 = vmatpush1.bf16.msra.mxu0 %v669
        %727 = vmatprep.subr.bf16.mxu0 0
        %728 = vmatpush1.bf16.msra.mxu0 %v668
        %729 = vmatprep.subr.bf16.mxu0 0
        %730 = vmatpush1.bf16.msra.mxu0 %v667
        %731 = vmatprep.subr.bf16.mxu0 0
        %732 = vmatpush2.bf16.msra.mxu0 %v682
        %733 = vmatprep.subr.bf16.mxu0 0
        %734 = vmatpush2.bf16.msra.mxu0 %v681
        %735 = vmatprep.subr.bf16.mxu0 0
        %736 = vmatpush2.bf16.msra.mxu0 %v680
        %737 = vmatprep.subr.bf16.mxu0 0
        %738 = vmatpush2.bf16.msra.mxu0 %v679
        %739 = vmatprep.subr.bf16.mxu0 0
        %740 = vmatpush2.bf16.msra.mxu0 %v678
        %741 = vmatprep.subr.bf16.mxu0 0
        %742 = vmatpush2.bf16.msra.mxu0 %v677
        %743 = vmatprep.subr.bf16.mxu0 0
        %744 = vmatpush2.bf16.msra.mxu0 %v676
        %745 = vmatprep.subr.bf16.mxu0 0
        %746 = vmatpush2.bf16.msra.mxu0 %v675
        %747 = vmatprep.mubr.bf16.mxu0 %v569
        %748 = vmatmul.mubr.bf16.gmra.mxu0 %v568
        %v749 = vpop.f32.mrf.mxu0
        %v750 = vadd.f32 0.0, %v749
        %v751 = vpop.f32.mrf.mxu0
        %v752 = vpop.f32.mrf.mxu0
        %v753 = vadd.f32 0.0, %v752
        %v754 = vpop.f32.mrf.mxu0
        %755 = vdwg.mxu0
        %756 = vmatprep.subr.bf16.mxu0 0
        %757 = vmatpush1.bf16.msra.mxu0 %v690
        %758 = vmatprep.subr.bf16.mxu0 0
        %759 = vmatpush1.bf16.msra.mxu0 %v689
        %760 = vmatprep.subr.bf16.mxu0 0
        %761 = vmatpush1.bf16.msra.mxu0 %v688
        %762 = vmatprep.subr.bf16.mxu0 0
        %763 = vmatpush1.bf16.msra.mxu0 %v687
        %764 = vmatprep.subr.bf16.mxu0 0
        %765 = vmatpush1.bf16.msra.mxu0 %v686
        %766 = vmatprep.subr.bf16.mxu0 0
        %767 = vmatpush1.bf16.msra.mxu0 %v685
        %768 = vmatprep.subr.bf16.mxu0 0
        %769 = vmatpush1.bf16.msra.mxu0 %v684
        %770 = vmatprep.subr.bf16.mxu0 0
        %771 = vmatpush1.bf16.msra.mxu0 %v683
        %772 = vmatprep.subr.bf16.mxu0 0
        %773 = vmatpush2.bf16.msra.mxu0 0
        %774 = vmatprep.subr.bf16.mxu0 0
        %775 = vmatpush2.bf16.msra.mxu0 0
        %776 = vmatprep.subr.bf16.mxu0 0
        %777 = vmatpush2.bf16.msra.mxu0 0
        %778 = vmatprep.subr.bf16.mxu0 0
        %779 = vmatpush2.bf16.msra.mxu0 0
        %780 = vmatprep.subr.bf16.mxu0 0
        %781 = vmatpush2.bf16.msra.mxu0 0
        %782 = vmatprep.subr.bf16.mxu0 0
        %783 = vmatpush2.bf16.msra.mxu0 0
        %784 = vmatprep.subr.bf16.mxu0 0
        %785 = vmatpush2.bf16.msra.mxu0 0
        %786 = vmatprep.subr.bf16.mxu0 0
        %787 = vmatpush2.bf16.msra.mxu0 0
        %788 = vmatprep.mubr.bf16.mxu0 0
        %789 = vmatmul.mubr.bf16.gmra.mxu0 %v570
        %v790 = vpop.f32.mrf.mxu0
        %v791 = vadd.f32 %v750, %v790
        %v792 = vpop.f32.mrf.mxu0
        %v793 = vpop.f32.mrf.mxu0
        %v794 = vadd.f32 %v753, %v793
        %v795 = vpop.f32.mrf.mxu0
        %796 = vdwg.mxu0
        %v797 = vmul.f32 %v791, %v545
        %v798 = vmul.f32 %v794, %v545
        %v799 = vadd.f32 %v797, %v552
        %v800 = vadd.f32 %v798, %v552
        %v801 = vmax.f32 %v799, 0.0
        %v802 = vmax.f32 %v800, 0.0
        %v803 = vadd.f32 %v486, %v801
        %v804 = vadd.f32 %v489, %v802
        %v805 = vrot.slane %v803, 7
        %v806 = vrot.slane %v804, 7
        %v807 = vsel %vm556, %v805, %v806
        %v808 = vsel %vm556, %v806, %v805
        %v809 = vsel %vm401, %v808, 0.0
        %v810 = vsel %vm402, %v807, 0.0
        %v811 = vrot.slane %v803, 1
        %v812 = vrot.slane %v804, 1
        %v813 = vsel %vm563, %v811, %v812
        %v814 = vsel %vm563, %v812, %v811
        %v815 = vsel %vm403, %v813, 0.0
        %v816 = vsel %vm404, %v814, 0.0
        %v817 = vpack.c.bf16 %v810, %v809
        %v818 = vpack.c.bf16 %v804, %v803
        %v819 = vpack.c.bf16 %v816, %v815
        %820 = vmatprep.subr.bf16.mxu0 0
        %821 = vmatpush1.bf16.msra.mxu0 %v674
        %822 = vmatprep.subr.bf16.mxu0 0
        %823 = vmatpush1.bf16.msra.mxu0 %v673
        %824 = vmatprep.subr.bf16.mxu0 0
        %825 = vmatpush1.bf16.msra.mxu0 %v672
        %826 = vmatprep.subr.bf16.mxu0 0
        %827 = vmatpush1.bf16.msra.mxu0 %v671
        %828 = vmatprep.subr.bf16.mxu0 0
        %829 = vmatpush1.bf16.msra.mxu0 %v670
        %830 = vmatprep.subr.bf16.mxu0 0
        %831 = vmatpush1.bf16.msra.mxu0 %v669
        %832 = vmatprep.subr.bf16.mxu0 0
        %833 = vmatpush1.bf16.msra.mxu0 %v668
        %834 = vmatprep.subr.bf16.mxu0 0
        %835 = vmatpush1.bf16.msra.mxu0 %v667
        %836 = vmatprep.subr.bf16.mxu0 0
        %837 = vmatpush2.bf16.msra.mxu0 %v682
        %838 = vmatprep.subr.bf16.mxu0 0
        %839 = vmatpush2.bf16.msra.mxu0 %v681
        %840 = vmatprep.subr.bf16.mxu0 0
        %841 = vmatpush2.bf16.msra.mxu0 %v680
        %842 = vmatprep.subr.bf16.mxu0 0
        %843 = vmatpush2.bf16.msra.mxu0 %v679
        %844 = vmatprep.subr.bf16.mxu0 0
        %845 = vmatpush2.bf16.msra.mxu0 %v678
        %846 = vmatprep.subr.bf16.mxu0 0
        %847 = vmatpush2.bf16.msra.mxu0 %v677
        %848 = vmatprep.subr.bf16.mxu0 0
        %849 = vmatpush2.bf16.msra.mxu0 %v676
        %850 = vmatprep.subr.bf16.mxu0 0
        %851 = vmatpush2.bf16.msra.mxu0 %v675
        %852 = vmatprep.mubr.bf16.mxu0 %v818
        %853 = vmatmul.mubr.bf16.gmra.mxu0 %v817
        %v854 = vpop.f32.mrf.mxu0
        %v855 = vadd.f32 0.0, %v854
        %v856 = vpop.f32.mrf.mxu0
        %v857 = vpop.f32.mrf.mxu0
        %v858 = vadd.f32 0.0, %v857
        %v859 = vpop.f32.mrf.mxu0
        %860 = vdwg.mxu0
        %861 = vmatprep.subr.bf16.mxu0 0
        %862 = vmatpush1.bf16.msra.mxu0 %v690
        %863 = vmatprep.subr.bf16.mxu0 0
        %864 = vmatpush1.bf16.msra.mxu0 %v689
        %865 = vmatprep.subr.bf16.mxu0 0
        %866 = vmatpush1.bf16.msra.mxu0 %v688
        %867 = vmatprep.subr.bf16.mxu0 0
        %868 = vmatpush1.bf16.msra.mxu0 %v687
        %869 = vmatprep.subr.bf16.mxu0 0
        %870 = vmatpush1.bf16.msra.mxu0 %v686
        %871 = vmatprep.subr.bf16.mxu0 0
        %872 = vmatpush1.bf16.msra.mxu0 %v685
        %873 = vmatprep.subr.bf16.mxu0 0
        %874 = vmatpush1.bf16.msra.mxu0 %v684
        %875 = vmatprep.subr.bf16.mxu0 0
        %876 = vmatpush1.bf16.msra.mxu0 %v683
        %877 = vmatprep.subr.bf16.mxu0 0
        %878 = vmatpush2.bf16.msra.mxu0 0
        %879 = vmatprep.subr.bf16.mxu0 0
        %880 = vmatpush2.bf16.msra.mxu0 0
        %881 = vmatprep.subr.bf16.mxu0 0
        %882 = vmatpush2.bf16.msra.mxu0 0
        %883 = vmatprep.subr.bf16.mxu0 0
        %884 = vmatpush2.bf16.msra.mxu0 0
        %885 = vmatprep.subr.bf16.mxu0 0
        %886 = vmatpush2.bf16.msra.mxu0 0
        %887 = vmatprep.subr.bf16.mxu0 0
        %888 = vmatpush2.bf16.msra.mxu0 0
        %889 = vmatprep.subr.bf16.mxu0 0
        %890 = vmatpush2.bf16.msra.mxu0 0
        %891 = vmatprep.subr.bf16.mxu0 0
        %892 = vmatpush2.bf16.msra.mxu0 0
        %893 = vmatprep.mubr.bf16.mxu0 0
        %894 = vmatmul.mubr.bf16.gmra.mxu0 %v819
        %v895 = vpop.f32.mrf.mxu0
        %v896 = vadd.f32 %v855, %v895
        %v897 = vpop.f32.mrf.mxu0
        %v898 = vpop.f32.mrf.mxu0
        %v899 = vadd.f32 %v858, %v898
        %v900 = vpop.f32.mrf.mxu0
        %901 = vdwg.mxu0
        %v902 = vmul.f32 %v896, %v545
        %v903 = vmul.f32 %v899, %v545
        %v904 = vadd.f32 %v902, %v552
        %v905 = vadd.f32 %v903, %v552
        %v906 = vmax.f32 %v904, 0.0
        %v907 = vmax.f32 %v905, 0.0
        %v908 = vadd.f32 %v486, %v906
        %v909 = vadd.f32 %v489, %v907
        %v910 = vrot.slane %v908, 7
        %v911 = vrot.slane %v909, 7
        %v912 = vsel %vm556, %v910, %v911
        %v913 = vsel %vm556, %v911, %v910
        %v914 = vsel %vm401, %v913, 0.0
        %v915 = vsel %vm402, %v912, 0.0
        %v916 = vrot.slane %v908, 1
        %v917 = vrot.slane %v909, 1
        %v918 = vsel %vm563, %v916, %v917
        %v919 = vsel %vm563, %v917, %v916
        %v920 = vsel %vm403, %v918, 0.0
        %v921 = vsel %vm404, %v919, 0.0
        %v922 = vpack.c.bf16 %v915, %v914
        %v923 = vpack.c.bf16 %v909, %v908
        %v924 = vpack.c.bf16 %v921, %v920
        %925 = vmatprep.subr.bf16.mxu0 0
        %926 = vmatpush1.bf16.msra.mxu0 %v674
        %927 = vmatprep.subr.bf16.mxu0 0
        %928 = vmatpush1.bf16.msra.mxu0 %v673
        %929 = vmatprep.subr.bf16.mxu0 0
        %930 = vmatpush1.bf16.msra.mxu0 %v672
        %931 = vmatprep.subr.bf16.mxu0 0
        %932 = vmatpush1.bf16.msra.mxu0 %v671
        %933 = vmatprep.subr.bf16.mxu0 0
        %934 = vmatpush1.bf16.msra.mxu0 %v670
        %935 = vmatprep.subr.bf16.mxu0 0
        %936 = vmatpush1.bf16.msra.mxu0 %v669
        %937 = vmatprep.subr.bf16.mxu0 0
        %938 = vmatpush1.bf16.msra.mxu0 %v668
        %939 = vmatprep.subr.bf16.mxu0 0
        %940 = vmatpush1.bf16.msra.mxu0 %v667
        %941 = vmatprep.subr.bf16.mxu0 0
        %942 = vmatpush2.bf16.msra.mxu0 %v682
        %943 = vmatprep.subr.bf16.mxu0 0
        %944 = vmatpush2.bf16.msra.mxu0 %v681
        %945 = vmatprep.subr.bf16.mxu0 0
        %946 = vmatpush2.bf16.msra.mxu0 %v680
        %947 = vmatprep.subr.bf16.mxu0 0
        %948 = vmatpush2.bf16.msra.mxu0 %v679
        %949 = vmatprep.subr.bf16.mxu0 0
        %950 = vmatpush2.bf16.msra.mxu0 %v678
        %951 = vmatprep.subr.bf16.mxu0 0
        %952 = vmatpush2.bf16.msra.mxu0 %v677
        %953 = vmatprep.subr.bf16.mxu0 0
        %954 = vmatpush2.bf16.msra.mxu0 %v676
        %955 = vmatprep.subr.bf16.mxu0 0
        %956 = vmatpush2.bf16.msra.mxu0 %v675
        %957 = vmatprep.mubr.bf16.mxu0 %v923
        %958 = vmatmul.mubr.bf16.gmra.mxu0 %v922
        %v959 = vpop.f32.mrf.mxu0
        %v960 = vadd.f32 0.0, %v959
        %v961 = vpop.f32.mrf.mxu0
        %v962 = vpop.f32.mrf.mxu0
        %v963 = vadd.f32 0.0, %v962
        %v964 = vpop.f32.mrf.mxu0
        %965 = vdwg.mxu0
        %966 = vmatprep.subr.bf16.mxu0 0
        %967 = vmatpush1.bf16.msra.mxu0 %v690
        %968 = vmatprep.subr.bf16.mxu0 0
        %969 = vmatpush1.bf16.msra.mxu0 %v689
        %970 = vmatprep.subr.bf16.mxu0 0
        %971 = vmatpush1.bf16.msra.mxu0 %v688
        %972 = vmatprep.subr.bf16.mxu0 0
        %973 = vmatpush1.bf16.msra.mxu0 %v687
        %974 = vmatprep.subr.bf16.mxu0 0
        %975 = vmatpush1.bf16.msra.mxu0 %v686
        %976 = vmatprep.subr.bf16.mxu0 0
        %977 = vmatpush1.bf16.msra.mxu0 %v685
        %978 = vmatprep.subr.bf16.mxu0 0
        %979 = vmatpush1.bf16.msra.mxu0 %v684
        %980 = vmatprep.subr.bf16.mxu0 0
        %981 = vmatpush1.bf16.msra.mxu0 %v683
        %982 = vmatprep.subr.bf16.mxu0 0
        %983 = vmatpush2.bf16.msra.mxu0 0
        %984 = vmatprep.subr.bf16.mxu0 0
        %985 = vmatpush2.bf16.msra.mxu0 0
        %986 = vmatprep.subr.bf16.mxu0 0
        %987 = vmatpush2.bf16.msra.mxu0 0
        %988 = vmatprep.subr.bf16.mxu0 0
        %989 = vmatpush2.bf16.msra.mxu0 0
        %990 = vmatprep.subr.bf16.mxu0 0
        %991 = vmatpush2.bf16.msra.mxu0 0
        %992 = vmatprep.subr.bf16.mxu0 0
        %993 = vmatpush2.bf16.msra.mxu0 0
        %994 = vmatprep.subr.bf16.mxu0 0
        %995 = vmatpush2.bf16.msra.mxu0 0
        %996 = vmatprep.subr.bf16.mxu0 0
        %997 = vmatpush2.bf16.msra.mxu0 0
        %998 = vmatprep.mubr.bf16.mxu0 0
        %999 = vmatmul.mubr.bf16.gmra.mxu0 %v924
        %v1000 = vpop.f32.mrf.mxu0
        %v1001 = vadd.f32 %v960, %v1000
        %v1002 = vpop.f32.mrf.mxu0
        %v1003 = vpop.f32.mrf.mxu0
        %v1004 = vadd.f32 %v963, %v1003
        %v1005 = vpop.f32.mrf.mxu0
        %1006 = vdwg.mxu0
        %v1007 = vmul.f32 %v1001, %v545
        %v1008 = vmul.f32 %v1004, %v545
        %v1009 = vadd.f32 %v1007, %v552
        %v1010 = vadd.f32 %v1008, %v552
        %v1011 = vmax.f32 %v1009, 0.0
        %v1012 = vmax.f32 %v1010, 0.0
        %v1013 = vld [vmem:[#allocation8] sm:$0xf]
        %v1014 = vld [vmem:[#allocation8 + $0x4] sm:$0xf]
        %v1015 = vld [vmem:[#allocation8 + $0x8] sm:$0xf]
        %v1016 = vld [vmem:[#allocation8 + $0xc] sm:$0xf]
        %v1017 = vld [vmem:[#allocation8 + $0x10] sm:$0xf]
        %v1018 = vld [vmem:[#allocation8 + $0x14] sm:$0xf]
        %v1019 = vld [vmem:[#allocation8 + $0x18] sm:$0xf]
        %v1020 = vld [vmem:[#allocation8 + $0x1c] sm:$0xf]
        %v1021 = vld [vmem:[#allocation8 + $0x20] sm:$0xf]
        %v1022 = vld [vmem:[#allocation8 + $0x24] sm:$0xf]
        %v1023 = vld [vmem:[#allocation8 + $0x28] sm:$0xf]
        %v1024 = vld [vmem:[#allocation8 + $0x2c] sm:$0xf]
        %v1025 = vld [vmem:[#allocation8 + $0x30] sm:$0xf]
        %v1026 = vld [vmem:[#allocation8 + $0x34] sm:$0xf]
        %v1027 = vld [vmem:[#allocation8 + $0x38] sm:$0xf]
        %v1028 = vld [vmem:[#allocation8 + $0x3c] sm:$0xf]
        %v1029 = vld [vmem:[#allocation8 + $0x40] sm:$0xf]
        %v1030 = vld [vmem:[#allocation8 + $0x44] sm:$0xf]
        %v1031 = vld [vmem:[#allocation8 + $0x48] sm:$0xf]
        %v1032 = vld [vmem:[#allocation8 + $0x4c] sm:$0xf]
        %v1033 = vld [vmem:[#allocation8 + $0x50] sm:$0xf]
        %v1034 = vld [vmem:[#allocation8 + $0x54] sm:$0xf]
        %v1035 = vld [vmem:[#allocation8 + $0x58] sm:$0xf]
        %v1036 = vld [vmem:[#allocation8 + $0x5c] sm:$0xf]
        %v1037 = vld [vmem:[#allocation8 + $0x60] sm:$0xf]
        %v1038 = vld [vmem:[#allocation8 + $0x64] sm:$0xf]
        %v1039 = vld [vmem:[#allocation8 + $0x68] sm:$0xf]
        %v1040 = vld [vmem:[#allocation8 + $0x6c] sm:$0xf]
        %v1041 = vld [vmem:[#allocation8 + $0x70] sm:$0xf]
        %v1042 = vld [vmem:[#allocation8 + $0x74] sm:$0xf]
        %v1043 = vld [vmem:[#allocation8 + $0x78] sm:$0xf]
        %v1044 = vld [vmem:[#allocation8 + $0x7c] sm:$0xf]
        %v1045 = vld [vmem:[#allocation8 + $0x80] sm:$0xf]
        %v1046 = vld [vmem:[#allocation8 + $0x84] sm:$0xf]
        %v1047 = vld [vmem:[#allocation8 + $0x88] sm:$0xf]
        %v1048 = vld [vmem:[#allocation8 + $0x8c] sm:$0xf]
        %v1049 = vld [vmem:[#allocation8 + $0x90] sm:$0xf]
        %v1050 = vld [vmem:[#allocation8 + $0x94] sm:$0xf]
        %v1051 = vld [vmem:[#allocation8 + $0x98] sm:$0xf]
        %v1052 = vld [vmem:[#allocation8 + $0x9c] sm:$0xf]
        %v1053 = vld [vmem:[#allocation8 + $0xa0] sm:$0xf]
        %v1054 = vld [vmem:[#allocation8 + $0xa4] sm:$0xf]
        %v1055 = vld [vmem:[#allocation8 + $0xa8] sm:$0xf]
        %v1056 = vld [vmem:[#allocation8 + $0xac] sm:$0xf]
        %v1057 = vld [vmem:[#allocation8 + $0xb0] sm:$0xf]
        %v1058 = vld [vmem:[#allocation8 + $0xb4] sm:$0xf]
        %v1059 = vld [vmem:[#allocation8 + $0xb8] sm:$0xf]
        %v1060 = vld [vmem:[#allocation8 + $0xbc] sm:$0xf]
        %v1061 = vld [vmem:[%s7] sm:$0x1]
        %v1063 = vlaneseq
        %v1064 = vshrl.u32 %v1063, 7
        %v1065 = vsub.s32 0, %v1064
        %v1066 = vrot.slane %v1061, %v1065
        %v1068 = vld [vmem:[%s8] sm:$0x1]
        %v1070 = vlaneseq
        %v1071 = vshrl.u32 %v1070, 7
        %v1072 = vsub.s32 0, %v1071
        %v1073 = vrot.slane %v1068, %v1072
        %v1075 = vrot.slane %v1011, 7
        %v1076 = vrot.slane %v1012, 7
        %v1077 = vsel %vm556, %v1075, %v1076
        %v1078 = vsel %vm556, %v1076, %v1075
        %v1079 = vsel %vm401, %v1078, 0.0
        %v1080 = vsel %vm402, %v1077, 0.0
        %v1081 = vrot.slane %v1011, 1
        %v1082 = vrot.slane %v1012, 1
        %v1083 = vsel %vm563, %v1081, %v1082
        %v1084 = vsel %vm563, %v1082, %v1081
        %v1085 = vsel %vm403, %v1083, 0.0
        %v1086 = vsel %vm404, %v1084, 0.0
        %v1087 = vpack.c.bf16 %v1080, %v1079
        %v1088 = vpack.c.bf16 %v1012, %v1011
        %v1089 = vpack.c.bf16 %v1086, %v1085
        %v1138 = vunpack.c.l.b16 %v1013
        %v1139 = vunpack.c.l.b16 %v1014
        %v1140 = vunpack.c.l.b16 %v1015
        %v1141 = vunpack.c.l.b16 %v1016
        %v1142 = vunpack.c.l.b16 %v1017
        %v1143 = vunpack.c.l.b16 %v1018
        %v1144 = vunpack.c.l.b16 %v1019
        %v1145 = vunpack.c.l.b16 %v1020
        %v1146 = vunpack.c.l.b16 %v1021
        %v1147 = vunpack.c.l.b16 %v1022
        %v1148 = vunpack.c.l.b16 %v1023
        %v1149 = vunpack.c.l.b16 %v1024
        %v1150 = vunpack.c.l.b16 %v1025
        %v1151 = vunpack.c.l.b16 %v1026
        %v1152 = vunpack.c.l.b16 %v1027
        %v1153 = vunpack.c.l.b16 %v1028
        %v1154 = vunpack.c.l.b16 %v1029
        %v1155 = vunpack.c.l.b16 %v1030
        %v1156 = vunpack.c.l.b16 %v1031
        %v1157 = vunpack.c.l.b16 %v1032
        %v1158 = vunpack.c.l.b16 %v1033
        %v1159 = vunpack.c.l.b16 %v1034
        %v1160 = vunpack.c.l.b16 %v1035
        %v1161 = vunpack.c.l.b16 %v1036
        %v1162 = vunpack.c.l.b16 %v1037
        %v1163 = vunpack.c.l.b16 %v1038
        %v1164 = vunpack.c.l.b16 %v1039
        %v1165 = vunpack.c.l.b16 %v1040
        %v1166 = vunpack.c.l.b16 %v1041
        %v1167 = vunpack.c.l.b16 %v1042
        %v1168 = vunpack.c.l.b16 %v1043
        %v1169 = vunpack.c.l.b16 %v1044
        %v1170 = vunpack.c.l.b16 %v1045
        %v1171 = vunpack.c.l.b16 %v1046
        %v1172 = vunpack.c.l.b16 %v1047
        %v1173 = vunpack.c.l.b16 %v1048
        %v1174 = vunpack.c.l.b16 %v1049
        %v1175 = vunpack.c.l.b16 %v1050
        %v1176 = vunpack.c.l.b16 %v1051
        %v1177 = vunpack.c.l.b16 %v1052
        %v1178 = vunpack.c.l.b16 %v1053
        %v1179 = vunpack.c.l.b16 %v1054
        %v1180 = vunpack.c.l.b16 %v1055
        %v1181 = vunpack.c.l.b16 %v1056
        %v1182 = vunpack.c.l.b16 %v1057
        %v1183 = vunpack.c.l.b16 %v1058
        %v1184 = vunpack.c.l.b16 %v1059
        %v1185 = vunpack.c.l.b16 %v1060
        %v1186 = vpack.c.b16 %v1139, %v1138
        %v1187 = vpack.c.b16 %v1141, %v1140
        %v1188 = vpack.c.b16 %v1143, %v1142
        %v1189 = vpack.c.b16 %v1145, %v1144
        %v1190 = vpack.c.b16 %v1147, %v1146
        %v1191 = vpack.c.b16 %v1149, %v1148
        %v1192 = vpack.c.b16 %v1151, %v1150
        %v1193 = vpack.c.b16 %v1153, %v1152
        %v1194 = vpack.c.b16 %v1155, %v1154
        %v1195 = vpack.c.b16 %v1157, %v1156
        %v1196 = vpack.c.b16 %v1159, %v1158
        %v1197 = vpack.c.b16 %v1161, %v1160
        %v1198 = vpack.c.b16 %v1163, %v1162
        %v1199 = vpack.c.b16 %v1165, %v1164
        %v1200 = vpack.c.b16 %v1167, %v1166
        %v1201 = vpack.c.b16 %v1169, %v1168
        %v1202 = vpack.c.b16 %v1171, %v1170
        %v1203 = vpack.c.b16 %v1173, %v1172
        %v1204 = vpack.c.b16 %v1175, %v1174
        %v1205 = vpack.c.b16 %v1177, %v1176
        %v1206 = vpack.c.b16 %v1179, %v1178
        %v1207 = vpack.c.b16 %v1181, %v1180
        %v1208 = vpack.c.b16 %v1183, %v1182
        %v1209 = vpack.c.b16 %v1185, %v1184
        %1234 = vmatprep.subr.bf16.mxu0 0
        %1235 = vmatpush1.bf16.msra.mxu0 %v1193
        %1236 = vmatprep.subr.bf16.mxu0 0
        %1237 = vmatpush1.bf16.msra.mxu0 %v1192
        %1238 = vmatprep.subr.bf16.mxu0 0
        %1239 = vmatpush1.bf16.msra.mxu0 %v1191
        %1240 = vmatprep.subr.bf16.mxu0 0
        %1241 = vmatpush1.bf16.msra.mxu0 %v1190
        %1242 = vmatprep.subr.bf16.mxu0 0
        %1243 = vmatpush1.bf16.msra.mxu0 %v1189
        %1244 = vmatprep.subr.bf16.mxu0 0
        %1245 = vmatpush1.bf16.msra.mxu0 %v1188
        %1246 = vmatprep.subr.bf16.mxu0 0
        %1247 = vmatpush1.bf16.msra.mxu0 %v1187
        %1248 = vmatprep.subr.bf16.mxu0 0
        %1249 = vmatpush1.bf16.msra.mxu0 %v1186
        %1250 = vmatprep.subr.bf16.mxu0 0
        %1251 = vmatpush2.bf16.msra.mxu0 %v1201
        %1252 = vmatprep.subr.bf16.mxu0 0
        %1253 = vmatpush2.bf16.msra.mxu0 %v1200
        %1254 = vmatprep.subr.bf16.mxu0 0
        %1255 = vmatpush2.bf16.msra.mxu0 %v1199
        %1256 = vmatprep.subr.bf16.mxu0 0
        %1257 = vmatpush2.bf16.msra.mxu0 %v1198
        %1258 = vmatprep.subr.bf16.mxu0 0
        %1259 = vmatpush2.bf16.msra.mxu0 %v1197
        %1260 = vmatprep.subr.bf16.mxu0 0
        %1261 = vmatpush2.bf16.msra.mxu0 %v1196
        %1262 = vmatprep.subr.bf16.mxu0 0
        %1263 = vmatpush2.bf16.msra.mxu0 %v1195
        %1264 = vmatprep.subr.bf16.mxu0 0
        %1265 = vmatpush2.bf16.msra.mxu0 %v1194
        %1266 = vmatprep.mubr.bf16.mxu0 %v1088
        %1267 = vmatmul.mubr.bf16.gmra.mxu0 %v1087
        %v1268 = vpop.f32.mrf.mxu0
        %v1269 = vadd.f32 0.0, %v1268
        %v1270 = vpop.f32.mrf.mxu0
        %v1271 = vpop.f32.mrf.mxu0
        %v1272 = vadd.f32 0.0, %v1271
        %v1273 = vpop.f32.mrf.mxu0
        %1274 = vdwg.mxu0
        %1275 = vmatprep.subr.bf16.mxu0 0
        %1276 = vmatpush1.bf16.msra.mxu0 %v1209
        %1277 = vmatprep.subr.bf16.mxu0 0
        %1278 = vmatpush1.bf16.msra.mxu0 %v1208
        %1279 = vmatprep.subr.bf16.mxu0 0
        %1280 = vmatpush1.bf16.msra.mxu0 %v1207
        %1281 = vmatprep.subr.bf16.mxu0 0
        %1282 = vmatpush1.bf16.msra.mxu0 %v1206
        %1283 = vmatprep.subr.bf16.mxu0 0
        %1284 = vmatpush1.bf16.msra.mxu0 %v1205
        %1285 = vmatprep.subr.bf16.mxu0 0
        %1286 = vmatpush1.bf16.msra.mxu0 %v1204
        %1287 = vmatprep.subr.bf16.mxu0 0
        %1288 = vmatpush1.bf16.msra.mxu0 %v1203
        %1289 = vmatprep.subr.bf16.mxu0 0
        %1290 = vmatpush1.bf16.msra.mxu0 %v1202
        %1291 = vmatprep.subr.bf16.mxu0 0
        %1292 = vmatpush2.bf16.msra.mxu0 0
        %1293 = vmatprep.subr.bf16.mxu0 0
        %1294 = vmatpush2.bf16.msra.mxu0 0
        %1295 = vmatprep.subr.bf16.mxu0 0
        %1296 = vmatpush2.bf16.msra.mxu0 0
        %1297 = vmatprep.subr.bf16.mxu0 0
        %1298 = vmatpush2.bf16.msra.mxu0 0
        %1299 = vmatprep.subr.bf16.mxu0 0
        %1300 = vmatpush2.bf16.msra.mxu0 0
        %1301 = vmatprep.subr.bf16.mxu0 0
        %1302 = vmatpush2.bf16.msra.mxu0 0
        %1303 = vmatprep.subr.bf16.mxu0 0
        %1304 = vmatpush2.bf16.msra.mxu0 0
        %1305 = vmatprep.subr.bf16.mxu0 0
        %1306 = vmatpush2.bf16.msra.mxu0 0
        %1307 = vmatprep.mubr.bf16.mxu0 0
        %1308 = vmatmul.mubr.bf16.gmra.mxu0 %v1089
        %v1309 = vpop.f32.mrf.mxu0
        %v1310 = vadd.f32 %v1269, %v1309
        %v1311 = vpop.f32.mrf.mxu0
        %v1312 = vpop.f32.mrf.mxu0
        %v1313 = vadd.f32 %v1272, %v1312
        %v1314 = vpop.f32.mrf.mxu0
        %1315 = vdwg.mxu0
        %v1316 = vmul.f32 %v1310, %v1066
        %v1317 = vmul.f32 %v1313, %v1066
        %v1318 = vadd.f32 %v1316, %v1073
        %v1319 = vadd.f32 %v1317, %v1073
        %v1320 = vmax.f32 %v1318, 0.0
        %v1321 = vmax.f32 %v1319, 0.0
        %v1322 = vadd.f32 %v1011, %v1320
        %v1323 = vadd.f32 %v1012, %v1321
        %v1324 = vrot.slane %v1322, 7
        %v1325 = vrot.slane %v1323, 7
        %v1326 = vsel %vm556, %v1324, %v1325
        %v1327 = vsel %vm556, %v1325, %v1324
        %v1328 = vsel %vm401, %v1327, 0.0
        %v1329 = vsel %vm402, %v1326, 0.0
        %v1330 = vrot.slane %v1322, 1
        %v1331 = vrot.slane %v1323, 1
        %v1332 = vsel %vm563, %v1330, %v1331
        %v1333 = vsel %vm563, %v1331, %v1330
        %v1334 = vsel %vm403, %v1332, 0.0
        %v1335 = vsel %vm404, %v1333, 0.0
        %v1336 = vpack.c.bf16 %v1329, %v1328
        %v1337 = vpack.c.bf16 %v1323, %v1322
        %v1338 = vpack.c.bf16 %v1335, %v1334
        %1339 = vmatprep.subr.bf16.mxu0 0
        %1340 = vmatpush1.bf16.msra.mxu0 %v1193
        %1341 = vmatprep.subr.bf16.mxu0 0
        %1342 = vmatpush1.bf16.msra.mxu0 %v1192
        %1343 = vmatprep.subr.bf16.mxu0 0
        %1344 = vmatpush1.bf16.msra.mxu0 %v1191
        %1345 = vmatprep.subr.bf16.mxu0 0
        %1346 = vmatpush1.bf16.msra.mxu0 %v1190
        %1347 = vmatprep.subr.bf16.mxu0 0
        %1348 = vmatpush1.bf16.msra.mxu0 %v1189
        %1349 = vmatprep.subr.bf16.mxu0 0
        %1350 = vmatpush1.bf16.msra.mxu0 %v1188
        %1351 = vmatprep.subr.bf16.mxu0 0
        %1352 = vmatpush1.bf16.msra.mxu0 %v1187
        %1353 = vmatprep.subr.bf16.mxu0 0
        %1354 = vmatpush1.bf16.msra.mxu0 %v1186
        %1355 = vmatprep.subr.bf16.mxu0 0
        %1356 = vmatpush2.bf16.msra.mxu0 %v1201
        %1357 = vmatprep.subr.bf16.mxu0 0
        %1358 = vmatpush2.bf16.msra.mxu0 %v1200
        %1359 = vmatprep.subr.bf16.mxu0 0
        %1360 = vmatpush2.bf16.msra.mxu0 %v1199
        %1361 = vmatprep.subr.bf16.mxu0 0
        %1362 = vmatpush2.bf16.msra.mxu0 %v1198
        %1363 = vmatprep.subr.bf16.mxu0 0
        %1364 = vmatpush2.bf16.msra.mxu0 %v1197
        %1365 = vmatprep.subr.bf16.mxu0 0
        %1366 = vmatpush2.bf16.msra.mxu0 %v1196
        %1367 = vmatprep.subr.bf16.mxu0 0
        %1368 = vmatpush2.bf16.msra.mxu0 %v1195
        %1369 = vmatprep.subr.bf16.mxu0 0
        %1370 = vmatpush2.bf16.msra.mxu0 %v1194
        %1371 = vmatprep.mubr.bf16.mxu0 %v1337
        %1372 = vmatmul.mubr.bf16.gmra.mxu0 %v1336
        %v1373 = vpop.f32.mrf.mxu0
        %v1374 = vadd.f32 0.0, %v1373
        %v1375 = vpop.f32.mrf.mxu0
        %v1376 = vpop.f32.mrf.mxu0
        %v1377 = vadd.f32 0.0, %v1376
        %v1378 = vpop.f32.mrf.mxu0
        %1379 = vdwg.mxu0
        %1380 = vmatprep.subr.bf16.mxu0 0
        %1381 = vmatpush1.bf16.msra.mxu0 %v1209
        %1382 = vmatprep.subr.bf16.mxu0 0
        %1383 = vmatpush1.bf16.msra.mxu0 %v1208
        %1384 = vmatprep.subr.bf16.mxu0 0
        %1385 = vmatpush1.bf16.msra.mxu0 %v1207
        %1386 = vmatprep.subr.bf16.mxu0 0
        %1387 = vmatpush1.bf16.msra.mxu0 %v1206
        %1388 = vmatprep.subr.bf16.mxu0 0
        %1389 = vmatpush1.bf16.msra.mxu0 %v1205
        %1390 = vmatprep.subr.bf16.mxu0 0
        %1391 = vmatpush1.bf16.msra.mxu0 %v1204
        %1392 = vmatprep.subr.bf16.mxu0 0
        %1393 = vmatpush1.bf16.msra.mxu0 %v1203
        %1394 = vmatprep.subr.bf16.mxu0 0
        %1395 = vmatpush1.bf16.msra.mxu0 %v1202
        %1396 = vmatprep.subr.bf16.mxu0 0
        %1397 = vmatpush2.bf16.msra.mxu0 0
        %1398 = vmatprep.subr.bf16.mxu0 0
        %1399 = vmatpush2.bf16.msra.mxu0 0
        %1400 = vmatprep.subr.bf16.mxu0 0
        %1401 = vmatpush2.bf16.msra.mxu0 0
        %1402 = vmatprep.subr.bf16.mxu0 0
        %1403 = vmatpush2.bf16.msra.mxu0 0
        %1404 = vmatprep.subr.bf16.mxu0 0
        %1405 = vmatpush2.bf16.msra.mxu0 0
        %1406 = vmatprep.subr.bf16.mxu0 0
        %1407 = vmatpush2.bf16.msra.mxu0 0
        %1408 = vmatprep.subr.bf16.mxu0 0
        %1409 = vmatpush2.bf16.msra.mxu0 0
        %1410 = vmatprep.subr.bf16.mxu0 0
        %1411 = vmatpush2.bf16.msra.mxu0 0
        %1412 = vmatprep.mubr.bf16.mxu0 0
        %1413 = vmatmul.mubr.bf16.gmra.mxu0 %v1338
        %v1414 = vpop.f32.mrf.mxu0
        %v1415 = vadd.f32 %v1374, %v1414
        %v1416 = vpop.f32.mrf.mxu0
        %v1417 = vpop.f32.mrf.mxu0
        %v1418 = vadd.f32 %v1377, %v1417
        %v1419 = vpop.f32.mrf.mxu0
        %1420 = vdwg.mxu0
        %v1421 = vmul.f32 %v1415, %v1066
        %v1422 = vmul.f32 %v1418, %v1066
        %v1423 = vadd.f32 %v1421, %v1073
        %v1424 = vadd.f32 %v1422, %v1073
        %v1425 = vmax.f32 %v1423, 0.0
        %v1426 = vmax.f32 %v1424, 0.0
        %v1427 = vadd.f32 %v1011, %v1425
        %v1428 = vadd.f32 %v1012, %v1426
        %v1429 = vrot.slane %v1427, 7
        %v1430 = vrot.slane %v1428, 7
        %v1431 = vsel %vm556, %v1429, %v1430
        %v1432 = vsel %vm556, %v1430, %v1429
        %v1433 = vsel %vm401, %v1432, 0.0
        %v1434 = vsel %vm402, %v1431, 0.0
        %v1435 = vrot.slane %v1427, 1
        %v1436 = vrot.slane %v1428, 1
        %v1437 = vsel %vm563, %v1435, %v1436
        %v1438 = vsel %vm563, %v1436, %v1435
        %v1439 = vsel %vm403, %v1437, 0.0
        %v1440 = vsel %vm404, %v1438, 0.0
        %v1441 = vpack.c.bf16 %v1434, %v1433
        %v1442 = vpack.c.bf16 %v1428, %v1427
        %v1443 = vpack.c.bf16 %v1440, %v1439
        %1444 = vmatprep.subr.bf16.mxu0 0
        %1445 = vmatpush1.bf16.msra.mxu0 %v1193
        %1446 = vmatprep.subr.bf16.mxu0 0
        %1447 = vmatpush1.bf16.msra.mxu0 %v1192
        %1448 = vmatprep.subr.bf16.mxu0 0
        %1449 = vmatpush1.bf16.msra.mxu0 %v1191
        %1450 = vmatprep.subr.bf16.mxu0 0
        %1451 = vmatpush1.bf16.msra.mxu0 %v1190
        %1452 = vmatprep.subr.bf16.mxu0 0
        %1453 = vmatpush1.bf16.msra.mxu0 %v1189
        %1454 = vmatprep.subr.bf16.mxu0 0
        %1455 = vmatpush1.bf16.msra.mxu0 %v1188
        %1456 = vmatprep.subr.bf16.mxu0 0
        %1457 = vmatpush1.bf16.msra.mxu0 %v1187
        %1458 = vmatprep.subr.bf16.mxu0 0
        %1459 = vmatpush1.bf16.msra.mxu0 %v1186
        %1460 = vmatprep.subr.bf16.mxu0 0
        %1461 = vmatpush2.bf16.msra.mxu0 %v1201
        %1462 = vmatprep.subr.bf16.mxu0 0
        %1463 = vmatpush2.bf16.msra.mxu0 %v1200
        %1464 = vmatprep.subr.bf16.mxu0 0
        %1465 = vmatpush2.bf16.msra.mxu0 %v1199
        %1466 = vmatprep.subr.bf16.mxu0 0
        %1467 = vmatpush2.bf16.msra.mxu0 %v1198
        %1468 = vmatprep.subr.bf16.mxu0 0
        %1469 = vmatpush2.bf16.msra.mxu0 %v1197
        %1470 = vmatprep.subr.bf16.mxu0 0
        %1471 = vmatpush2.bf16.msra.mxu0 %v1196
        %1472 = vmatprep.subr.bf16.mxu0 0
        %1473 = vmatpush2.bf16.msra.mxu0 %v1195
        %1474 = vmatprep.subr.bf16.mxu0 0
        %1475 = vmatpush2.bf16.msra.mxu0 %v1194
        %1476 = vmatprep.mubr.bf16.mxu0 %v1442
        %1477 = vmatmul.mubr.bf16.gmra.mxu0 %v1441
        %v1478 = vpop.f32.mrf.mxu0
        %v1479 = vadd.f32 0.0, %v1478
        %v1480 = vpop.f32.mrf.mxu0
        %v1481 = vpop.f32.mrf.mxu0
        %v1482 = vadd.f32 0.0, %v1481
        %v1483 = vpop.f32.mrf.mxu0
        %1484 = vdwg.mxu0
        %1485 = vmatprep.subr.bf16.mxu0 0
        %1486 = vmatpush1.bf16.msra.mxu0 %v1209
        %1487 = vmatprep.subr.bf16.mxu0 0
        %1488 = vmatpush1.bf16.msra.mxu0 %v1208
        %1489 = vmatprep.subr.bf16.mxu0 0
        %1490 = vmatpush1.bf16.msra.mxu0 %v1207
        %1491 = vmatprep.subr.bf16.mxu0 0
        %1492 = vmatpush1.bf16.msra.mxu0 %v1206
        %1493 = vmatprep.subr.bf16.mxu0 0
        %1494 = vmatpush1.bf16.msra.mxu0 %v1205
        %1495 = vmatprep.subr.bf16.mxu0 0
        %1496 = vmatpush1.bf16.msra.mxu0 %v1204
        %1497 = vmatprep.subr.bf16.mxu0 0
        %1498 = vmatpush1.bf16.msra.mxu0 %v1203
        %1499 = vmatprep.subr.bf16.mxu0 0
        %1500 = vmatpush1.bf16.msra.mxu0 %v1202
        %1501 = vmatprep.subr.bf16.mxu0 0
        %1502 = vmatpush2.bf16.msra.mxu0 0
        %1503 = vmatprep.subr.bf16.mxu0 0
        %1504 = vmatpush2.bf16.msra.mxu0 0
        %1505 = vmatprep.subr.bf16.mxu0 0
        %1506 = vmatpush2.bf16.msra.mxu0 0
        %1507 = vmatprep.subr.bf16.mxu0 0
        %1508 = vmatpush2.bf16.msra.mxu0 0
        %1509 = vmatprep.subr.bf16.mxu0 0
        %1510 = vmatpush2.bf16.msra.mxu0 0
        %1511 = vmatprep.subr.bf16.mxu0 0
        %1512 = vmatpush2.bf16.msra.mxu0 0
        %1513 = vmatprep.subr.bf16.mxu0 0
        %1514 = vmatpush2.bf16.msra.mxu0 0
        %1515 = vmatprep.subr.bf16.mxu0 0
        %1516 = vmatpush2.bf16.msra.mxu0 0
        %1517 = vmatprep.mubr.bf16.mxu0 0
        %1518 = vmatmul.mubr.bf16.gmra.mxu0 %v1443
        %v1519 = vpop.f32.mrf.mxu0
        %v1520 = vadd.f32 %v1479, %v1519
        %v1521 = vpop.f32.mrf.mxu0
        %v1522 = vpop.f32.mrf.mxu0
        %v1523 = vadd.f32 %v1482, %v1522
        %v1524 = vpop.f32.mrf.mxu0
        %1525 = vdwg.mxu0
        %v1526 = vmul.f32 %v1520, %v1066
        %v1527 = vmul.f32 %v1523, %v1066
        %v1528 = vadd.f32 %v1526, %v1073
        %v1529 = vadd.f32 %v1527, %v1073
        %v1530 = vmax.f32 %v1528, 0.0
        %v1531 = vmax.f32 %v1529, 0.0
        %v1532 = vadd.f32 %v486, %v1530
        %v1533 = vadd.f32 %v489, %v1531
        %1534 = vst [vmem:[%s394] sm:$0xff] %v1532
        %1535 = vst [vmem:[%s394 + $0x8] sm:$0xff] %v1533
        %s1536 = sand.u32 %s230, 1
        %s1537 = scalar_lea.sflag [#allocation4], %s1536
        %s1538 = sand.u32 %s230, 1
        %s1539 = smul.addr %s1538, 16
        %s1540 = scalar_lea.vmem [#allocation10], %s1539
        // Predicated region
        $region73: #{tpu_custom_call.1} parent=55 // pred_check
          %p1541 = pneg %p240
        $region74: #{tpu_custom_call.1} parent=55 // pred_check_branch
          %1543 = sbr.rel (%p1541) target = $region76
        $region75: #{tpu_custom_call.1} parent=55 // pred_region
          %s1544 = smul.u32 2, %s28
          %s1546 = ssub.s32 256, 256
          %1547 = vsyncadd %s1537, %s1546
          %s1548 = smul.addr %s1544, 128
          %s1549 = scalar_lea.hbm %s9, %s1548
          %s1550 = sshll.u32 %s1540, 4
          %s1551 = int_to_ptr.vmem [resolvable:$true] %s1550
          %1556 = dma.vmem_to_hbm [thread:$0]  %s1551, 256, %s1549, %s1537, 128, 128, 8
        $region76: #{tpu_custom_call.1} parent=55 // pred_fallthru
          _
      $region56: #{tpu_custom_call.1} parent=5 // pred_fallthru
        _
      %p1557 = scmp.le.s32.totalorder 2, %s23
      // Predicated region
      $region77: #{tpu_custom_call.1} parent=5 // pred_check
        %p1558 = pneg %p1557
      $region78: #{tpu_custom_call.1} parent=5 // pred_check_branch
        %1560 = sbr.rel (%p1558) target = $region80
      $region79: #{tpu_custom_call.1} parent=5 // pred_region
        %s1561 = ssub.s32 %s23, 2
        // Predicated region
        $region81: #{tpu_custom_call.1} parent=79 // pred_check
          %p1562 = pneg %p246
        $region82: #{tpu_custom_call.1} parent=79 // pred_check_branch
          %1564 = sbr.rel (%p1562) target = $region84
        $region83: #{tpu_custom_call.1} parent=79 // pred_region
          %s1565 = sand.u32 %s231, 1
          %s1566 = scalar_lea.sflag [#allocation4], %s1565
          %s1567 = sand.u32 %s231, 1
          %s1568 = smul.addr %s1567, 16
          %s1569 = scalar_lea.vmem [#allocation10], %s1568
          %1570 = dma.done %s1566, 256
        $region84: #{tpu_custom_call.1} parent=79 // pred_fallthru
          _
      $region80: #{tpu_custom_call.1} parent=5 // pred_fallthru
        _
    $region6: #{tpu_custom_call.1} parent=1 // loop_footer
      %s27 = sadd.s32 1, %s23
    $region7: #{tpu_custom_call.1} parent=1 // loop_footer_branch
      %22 = sbr.rel target = $region3
    $region8: #{tpu_custom_call.1} parent=1 // loop_exit
      _
    %1571 = vsyncpa [#allocation3], 1
    %s1572 = scalar_lea.sflag [#allocation3], 1
    %1573 = vsyncpa %s1572, 1
    %1574 = vsyncpa [#allocation6], 1
    %1575 = vsyncpa [#allocation9], 1
    %1576 = vsyncpa [#allocation4], 1
    %s1577 = scalar_lea.sflag [#allocation4], 1
    %1578 = vsyncpa %s1577, 1

</llo_original>
